<compile_context>
chip_gen: v5e
topology: v5e:2x2
jax: 0.10.0
libtpu: 0.0.40
codegen_flags: <defaults>
</compile_context>

<pallas_src>
import functools

import jax
import jax.numpy as jnp
from jax.experimental import pallas as pl
from jax.experimental.pallas import tpu as pltpu

PAD = 256          # widest layer padding (lane / MXU friendly)
HALF = 128         # sigma columns live at lane offset 128 in the fused mu|sigma layer
EPS_OFF = HALF - 2 # eps occupies lanes [126:128] of the fused x|eps input slab
NUM_LAYERS = 8     # 3 encoder + fused(mu,sigma) + 3 decoder + output


# ---------------------------------------------------------------------------
# Kernel: whole MLP chain in one invocation, everything resident in VMEM.
#   x_ref   : (B, 128)        bf16  lanes [0:in_dim]=x, [126:128]=eps, rest 0
#   w_ref   : (8, 256, 256)   bf16  packed, zero-padded weights ([in, out])
#   b_ref   : (8, 1, 256)     f32   packed, zero-padded biases
#   out_ref : (2, B, 256)     f32   row 0 = padded recon, row 1 = mu|sigma slab
# ---------------------------------------------------------------------------
def vae_forward_kernel(x_ref, w_ref, b_ref, out_ref):
    def leaky_relu(v):                     # PyTorch default slope 0.01
        return jnp.maximum(v, 0.01 * v)

    def sigmoid(v):                        # exact: EUP exp + exact divide
        return 1.0 / (1.0 + jnp.exp(-v))

    def matmul(a, idx, k=PAD, n=PAD):
        # bf16 x bf16 MXU matmul, f32 accumulation, f32 bias add.
        return (jnp.dot(a.astype(jnp.bfloat16), w_ref[idx, :k, :n],
                        preferred_element_type=jnp.float32)
                + b_ref[idx, :, :n])

    x = x_ref[...]                                        # (B, 128) bf16

    # ----- encode -----
    a1 = leaky_relu(matmul(x, 0, k=HALF, n=HALF))         # (B, 128), real 40
    a2 = sigmoid(matmul(a1, 1, k=HALF))                   # (B, 256), real 150
    a3 = leaky_relu(matmul(a2, 2))                        # (B, 256), real hidden
    ms = matmul(a3, 3)                                    # mu @ 0:2, sigma @ 128:130

    # ----- reparameterize: z = mu + sigma * eps (two scalar lanes) -----
    eps01 = x[:, EPS_OFF:EPS_OFF + 2].astype(jnp.float32)          # (B, 2)
    z0 = ms[:, 0:1] + ms[:, HALF:HALF + 1] * eps01[:, 0:1]         # (B, 1)
    z1 = ms[:, 1:2] + ms[:, HALF + 1:HALF + 2] * eps01[:, 1:2]     # (B, 1)

    # ----- decode -----
    # d1 (real K = 2): two VPU broadcast-FMAs instead of an MXU matmul.
    w4_r0 = w_ref[4, 0:1, :HALF].astype(jnp.float32)      # (1, 128)
    w4_r1 = w_ref[4, 1:2, :HALF].astype(jnp.float32)      # (1, 128)
    d1 = leaky_relu(b_ref[4, :, :HALF] + z0 * w4_r0 + z1 * w4_r1)  # (B,128), real 100
    d2 = leaky_relu(matmul(d1, 5, k=HALF))                # (B, 256), real 200
    d3 = leaky_relu(matmul(d2, 6))                        # (B, 256), real 250
    recon = sigmoid(matmul(d3, 7))                        # (B, 256), real output_size

    # Single lane-dense output slab.
    out_ref[0] = recon
    out_ref[1] = ms


# ---------------------------------------------------------------------------
# Wrapper: build the fused x|eps slab, run the kernel, split the output slab.
# ---------------------------------------------------------------------------
def vae_forward(x, eps, w_packed, b_packed, output_size):
    batch, in_dim = x.shape
    assert in_dim <= EPS_OFF, "input_dim must fit below the eps lanes"

    # Single fused concat -> (B, 128) bf16: [x | zeros | eps].
    mid = jnp.zeros((batch, EPS_OFF - in_dim), jnp.bfloat16)
    x_eps = jnp.concatenate(
        [x.astype(jnp.bfloat16), mid, eps.astype(jnp.bfloat16)], axis=-1)

    vmem = pl.BlockSpec(memory_space=pltpu.MemorySpace.VMEM)
    out = pl.pallas_call(
        vae_forward_kernel,
        out_shape=jax.ShapeDtypeStruct((2, batch, PAD), jnp.float32),
        in_specs=[vmem, vmem, vmem],
        out_specs=vmem,
    )(x_eps, w_packed, b_packed)

    x_reconst = out[0, :, :output_size]
    mu = out[1, :, 0:2]
    sigma = out[1, :, HALF:HALF + 2]
    return x_reconst, mu, sigma


# ---------------------------------------------------------------------------
# Parameter init (PyTorch nn.Linear style: U(-1/sqrt(fan_in), +)), stored as
# [in, out] so the kernel computes y = x @ W + b, then packed + padded + bf16.
# ---------------------------------------------------------------------------
def init_params(key, input_dim, output_size, hidden_size):
    sizes = {
        "1": (input_dim, 40),
        "2": (40, 150),
        "3": (150, hidden_size),
        "_mu": (hidden_size, 2),
        "_sigma": (hidden_size, 2),
        "d1": (2, 100),
        "d2": (100, 200),
        "d3": (200, 250),
        "_out": (250, output_size),
    }
    params = {}
    for name, (fan_in, fan_out) in sizes.items():
        key, kw, kb = jax.random.split(key, 3)
        bound = 1.0 / (fan_in ** 0.5)
        params["w" + name] = jax.random.uniform(
            kw, (fan_in, fan_out), jnp.float32, -bound, bound)
        params["b" + name] = jax.random.uniform(
            kb, (1, fan_out), jnp.float32, -bound, bound)
    return params


def pack_params(params, input_dim, output_size, hidden_size):
    """Pack all layers into one zero-padded bf16 weight slab + one f32 bias slab."""
    layers = [
        ("w1", "b1", input_dim, 40),
        ("w2", "b2", 40, 150),
        ("w3", "b3", 150, hidden_size),
        None,  # fused mu|sigma layer handled below
        ("wd1", "bd1", 2, 100),
        ("wd2", "bd2", 100, 200),
        ("wd3", "bd3", 200, 250),
        ("w_out", "b_out", 250, output_size),
    ]
    w_packed = jnp.zeros((NUM_LAYERS, PAD, PAD), jnp.float32)
    b_packed = jnp.zeros((NUM_LAYERS, 1, PAD), jnp.float32)
    for i, spec in enumerate(layers):
        if spec is None:
            # mu columns at lanes 0:2, sigma columns at lanes 128:130.
            w_packed = w_packed.at[i, :hidden_size, 0:2].set(params["w_mu"])
            w_packed = w_packed.at[i, :hidden_size, HALF:HALF + 2].set(params["w_sigma"])
            b_packed = b_packed.at[i, 0, 0:2].set(params["b_mu"][0])
            b_packed = b_packed.at[i, 0, HALF:HALF + 2].set(params["b_sigma"][0])
        else:
            wk, bk, fan_in, fan_out = spec
            w_packed = w_packed.at[i, :fan_in, :fan_out].set(params[wk])
            b_packed = b_packed.at[i, 0, :fan_out].set(params[bk][0])
    return w_packed.astype(jnp.bfloat16), b_packed


# ---------------------------------------------------------------------------
# Pure-JAX f32 reference (uses the same packed -- i.e. bf16-rounded -- weights)
# ---------------------------------------------------------------------------
def vae_reference(x, eps, w_packed, b_packed, input_dim, output_size, hidden_size):
    wf = w_packed.astype(jnp.float32)
    bf = b_packed[:, 0, :]

    def lin(a, i, fi, fo, off=0):
        return a @ wf[i, :fi, off:off + fo] + bf[i, off:off + fo]

    lrelu = lambda v: jnp.maximum(v, 0.01 * v)
    sig = lambda v: 1.0 / (1.0 + jnp.exp(-v))

    xr = x.astype(jnp.bfloat16).astype(jnp.float32)
    er = eps.astype(jnp.bfloat16).astype(jnp.float32)
    a1 = lrelu(lin(xr, 0, input_dim, 40))
    a2 = sig(lin(a1, 1, 40, 150))
    a3 = lrelu(lin(a2, 2, 150, hidden_size))
    mu = lin(a3, 3, hidden_size, 2, off=0)
    sigma = lin(a3, 3, hidden_size, 2, off=HALF)
    z = mu + sigma * er
    d1 = lrelu(lin(z, 4, 2, 100))
    d2 = lrelu(lin(d1, 5, 100, 200))
    d3 = lrelu(lin(d2, 6, 200, 250))
    recon = sig(lin(d3, 7, 250, output_size))
    return recon, mu, sigma


if __name__ == "__main__":
    BATCH = 8
    INPUT_DIM = 16
    OUTPUT_SIZE = 16
    HIDDEN_SIZE = 200  # module default

    root = jax.random.PRNGKey(0)
    k_params, k_x, k_eps = jax.random.split(root, 3)

    params = init_params(k_params, INPUT_DIM, OUTPUT_SIZE, HIDDEN_SIZE)
    w_packed, b_packed = pack_params(params, INPUT_DIM, OUTPUT_SIZE, HIDDEN_SIZE)

    x = jax.random.normal(k_x, (BATCH, INPUT_DIM), jnp.float32)
    # epsilon ~ N(0,1), same shape as sigma (torch.randn_like(sigma)) — RNG host-side.
    eps = jax.random.normal(k_eps, (BATCH, 2), jnp.float32)

    fwd = jax.jit(functools.partial(vae_forward, output_size=OUTPUT_SIZE))
    x_reconst, mu, sigma = fwd(x, eps, w_packed, b_packed)
    jax.block_until_ready((x_reconst, mu, sigma))

    assert x_reconst.shape == (BATCH, OUTPUT_SIZE)
    assert mu.shape == (BATCH, 2) and sigma.shape == (BATCH, 2)
    assert bool(jnp.all(jnp.isfinite(x_reconst)))
    assert bool(jnp.all(jnp.isfinite(mu))) and bool(jnp.all(jnp.isfinite(sigma)))

    # Correctness vs. f32 reference (bf16 activations -> loose tolerance).
    r_ref, mu_ref, sg_ref = vae_reference(
        x, eps, w_packed, b_packed, INPUT_DIM, OUTPUT_SIZE, HIDDEN_SIZE)
    assert bool(jnp.allclose(x_reconst, r_ref, atol=5e-2, rtol=5e-2))
    assert bool(jnp.allclose(mu, mu_ref, atol=5e-2, rtol=5e-2))
    assert bool(jnp.allclose(sigma, sg_ref, atol=5e-2, rtol=5e-2))

    print("KERNEL_OK")
</pallas_src>

<mosaic_0001>
module attributes {stable_mosaic.version = 11 : i64} {
  func.func @vae_forward_kernel(%arg0: memref<8x128xbf16, #tpu.memory_space<vmem>>, %arg1: memref<8x256x256xbf16, #tpu.memory_space<vmem>>, %arg2: memref<8x1x256xf32, #tpu.memory_space<vmem>>, %arg3: memref<2x8x256xf32, #tpu.memory_space<vmem>>) attributes {dimension_semantics = [], scalar_prefetch = 0 : i64, scratch_operands = 0 : i64, tpu.core_type = #tpu.core_type<tc>} {
    %c0 = arith.constant 0 : index
    %c0_0 = arith.constant 0 : index
    %0 = vector.load %arg0[%c0, %c0_0] : memref<8x128xbf16, #tpu.memory_space<vmem>>, vector<8x128xbf16>
    %c0_1 = arith.constant 0 : index
    %c0_2 = arith.constant 0 : index
    %c0_3 = arith.constant 0 : index
    %1 = vector.load %arg1[%c0_1, %c0_2, %c0_3] : memref<8x256x256xbf16, #tpu.memory_space<vmem>>, vector<1x128x128xbf16>
    %2 = vector.shape_cast %1 : vector<1x128x128xbf16> to vector<128x128xbf16>
    %cst = arith.constant dense<0.000000e+00> : vector<8x128xf32>
    %3 = tpu.matmul %0, %2, %cst {dimension_numbers = #tpu.dot_dimension_numbers<[1], [0], [0], [1], [0, 0, 1, 1], [], []>} : vector<8x128xbf16>, vector<128x128xbf16>, vector<8x128xf32> -> vector<8x128xf32>
    %c0_4 = arith.constant 0 : index
    %c0_5 = arith.constant 0 : index
    %c0_6 = arith.constant 0 : index
    %4 = vector.load %arg2[%c0_4, %c0_5, %c0_6] : memref<8x1x256xf32, #tpu.memory_space<vmem>>, vector<1x1x128xf32>
    %5 = vector.shape_cast %4 : vector<1x1x128xf32> to vector<1x128xf32>
    %6 = vector.broadcast %5 : vector<1x128xf32> to vector<8x128xf32>
    %7 = arith.addf %3, %6 : vector<8x128xf32>
    %cst_7 = arith.constant 0.00999999977 : f32
    %8 = vector.broadcast %cst_7 : f32 to vector<8x128xf32>
    %9 = arith.mulf %8, %7 : vector<8x128xf32>
    %10 = arith.maximumf %7, %9 : vector<8x128xf32>
    %11 = arith.truncf %10 : vector<8x128xf32> to vector<8x128xbf16>
    %c1 = arith.constant 1 : index
    %c0_8 = arith.constant 0 : index
    %c0_9 = arith.constant 0 : index
    %12 = vector.load %arg1[%c1, %c0_8, %c0_9] : memref<8x256x256xbf16, #tpu.memory_space<vmem>>, vector<1x128x256xbf16>
    %13 = vector.shape_cast %12 : vector<1x128x256xbf16> to vector<128x256xbf16>
    %cst_10 = arith.constant dense<0.000000e+00> : vector<8x256xf32>
    %14 = tpu.matmul %11, %13, %cst_10 {dimension_numbers = #tpu.dot_dimension_numbers<[1], [0], [0], [1], [0, 0, 1, 1], [], []>} : vector<8x128xbf16>, vector<128x256xbf16>, vector<8x256xf32> -> vector<8x256xf32>
    %c1_11 = arith.constant 1 : index
    %c0_12 = arith.constant 0 : index
    %c0_13 = arith.constant 0 : index
    %15 = vector.load %arg2[%c1_11, %c0_12, %c0_13] : memref<8x1x256xf32, #tpu.memory_space<vmem>>, vector<1x1x256xf32>
    %16 = vector.shape_cast %15 : vector<1x1x256xf32> to vector<1x256xf32>
    %17 = vector.broadcast %16 : vector<1x256xf32> to vector<8x256xf32>
    %18 = arith.addf %14, %17 : vector<8x256xf32>
    %cst_14 = arith.constant 0.000000e+00 : f32
    %19 = vector.broadcast %cst_14 : f32 to vector<8x256xf32>
    %20 = arith.subf %19, %18 : vector<8x256xf32>
    %21 = math.exp %20 : vector<8x256xf32>
    %cst_15 = arith.constant 1.000000e+00 : f32
    %22 = vector.broadcast %cst_15 : f32 to vector<8x256xf32>
    %23 = arith.addf %22, %21 : vector<8x256xf32>
    %cst_16 = arith.constant 1.000000e+00 : f32
    %24 = vector.broadcast %cst_16 : f32 to vector<8x256xf32>
    %25 = arith.divf %24, %23 : vector<8x256xf32>
    %26 = arith.truncf %25 : vector<8x256xf32> to vector<8x256xbf16>
    %c2 = arith.constant 2 : index
    %c0_17 = arith.constant 0 : index
    %c0_18 = arith.constant 0 : index
    %27 = vector.load %arg1[%c2, %c0_17, %c0_18] : memref<8x256x256xbf16, #tpu.memory_space<vmem>>, vector<1x256x256xbf16>
    %28 = vector.shape_cast %27 : vector<1x256x256xbf16> to vector<256x256xbf16>
    %cst_19 = arith.constant dense<0.000000e+00> : vector<8x256xf32>
    %29 = tpu.matmul %26, %28, %cst_19 {dimension_numbers = #tpu.dot_dimension_numbers<[1], [0], [0], [1], [0, 0, 1, 1], [], []>} : vector<8x256xbf16>, vector<256x256xbf16>, vector<8x256xf32> -> vector<8x256xf32>
    %c2_20 = arith.constant 2 : index
    %c0_21 = arith.constant 0 : index
    %c0_22 = arith.constant 0 : index
    %30 = vector.load %arg2[%c2_20, %c0_21, %c0_22] : memref<8x1x256xf32, #tpu.memory_space<vmem>>, vector<1x1x256xf32>
    %31 = vector.shape_cast %30 : vector<1x1x256xf32> to vector<1x256xf32>
    %32 = vector.broadcast %31 : vector<1x256xf32> to vector<8x256xf32>
    %33 = arith.addf %29, %32 : vector<8x256xf32>
    %cst_23 = arith.constant 0.00999999977 : f32
    %34 = vector.broadcast %cst_23 : f32 to vector<8x256xf32>
    %35 = arith.mulf %34, %33 : vector<8x256xf32>
    %36 = arith.maximumf %33, %35 : vector<8x256xf32>
    %37 = arith.truncf %36 : vector<8x256xf32> to vector<8x256xbf16>
    %c3 = arith.constant 3 : index
    %c0_24 = arith.constant 0 : index
    %c0_25 = arith.constant 0 : index
    %38 = vector.load %arg1[%c3, %c0_24, %c0_25] : memref<8x256x256xbf16, #tpu.memory_space<vmem>>, vector<1x256x256xbf16>
    %39 = vector.shape_cast %38 : vector<1x256x256xbf16> to vector<256x256xbf16>
    %cst_26 = arith.constant dense<0.000000e+00> : vector<8x256xf32>
    %40 = tpu.matmul %37, %39, %cst_26 {dimension_numbers = #tpu.dot_dimension_numbers<[1], [0], [0], [1], [0, 0, 1, 1], [], []>} : vector<8x256xbf16>, vector<256x256xbf16>, vector<8x256xf32> -> vector<8x256xf32>
    %c3_27 = arith.constant 3 : index
    %c0_28 = arith.constant 0 : index
    %c0_29 = arith.constant 0 : index
    %41 = vector.load %arg2[%c3_27, %c0_28, %c0_29] : memref<8x1x256xf32, #tpu.memory_space<vmem>>, vector<1x1x256xf32>
    %42 = vector.shape_cast %41 : vector<1x1x256xf32> to vector<1x256xf32>
    %43 = vector.broadcast %42 : vector<1x256xf32> to vector<8x256xf32>
    %44 = arith.addf %40, %43 : vector<8x256xf32>
    %45 = vector.extract_strided_slice %0 {offsets = [0, 126], sizes = [8, 2], strides = [1, 1]} : vector<8x128xbf16> to vector<8x2xbf16>
    %46 = arith.extf %45 : vector<8x2xbf16> to vector<8x2xf32>
    %47 = vector.extract_strided_slice %44 {offsets = [0, 0], sizes = [8, 1], strides = [1, 1]} : vector<8x256xf32> to vector<8x1xf32>
    %48 = vector.extract_strided_slice %44 {offsets = [0, 128], sizes = [8, 1], strides = [1, 1]} : vector<8x256xf32> to vector<8x1xf32>
    %49 = vector.extract_strided_slice %46 {offsets = [0, 0], sizes = [8, 1], strides = [1, 1]} : vector<8x2xf32> to vector<8x1xf32>
    %50 = arith.mulf %48, %49 : vector<8x1xf32>
    %51 = arith.addf %47, %50 : vector<8x1xf32>
    %52 = vector.extract_strided_slice %44 {offsets = [0, 1], sizes = [8, 1], strides = [1, 1]} : vector<8x256xf32> to vector<8x1xf32>
    %53 = vector.extract_strided_slice %44 {offsets = [0, 129], sizes = [8, 1], strides = [1, 1]} : vector<8x256xf32> to vector<8x1xf32>
    %54 = vector.extract_strided_slice %46 {offsets = [0, 1], sizes = [8, 1], strides = [1, 1]} : vector<8x2xf32> to vector<8x1xf32>
    %55 = arith.mulf %53, %54 : vector<8x1xf32>
    %56 = arith.addf %52, %55 : vector<8x1xf32>
    %c4 = arith.constant 4 : index
    %c0_30 = arith.constant 0 : index
    %c0_31 = arith.constant 0 : index
    %57 = vector.load %arg1[%c4, %c0_30, %c0_31] : memref<8x256x256xbf16, #tpu.memory_space<vmem>>, vector<1x1x128xbf16>
    %58 = vector.shape_cast %57 : vector<1x1x128xbf16> to vector<1x128xbf16>
    %59 = arith.extf %58 : vector<1x128xbf16> to vector<1x128xf32>
    %c4_32 = arith.constant 4 : index
    %c1_33 = arith.constant 1 : index
    %c0_34 = arith.constant 0 : index
    %60 = vector.load %arg1[%c4_32, %c1_33, %c0_34] : memref<8x256x256xbf16, #tpu.memory_space<vmem>>, vector<1x1x128xbf16>
    %61 = vector.shape_cast %60 : vector<1x1x128xbf16> to vector<1x128xbf16>
    %62 = arith.extf %61 : vector<1x128xbf16> to vector<1x128xf32>
    %c4_35 = arith.constant 4 : index
    %c0_36 = arith.constant 0 : index
    %c0_37 = arith.constant 0 : index
    %63 = vector.load %arg2[%c4_35, %c0_36, %c0_37] : memref<8x1x256xf32, #tpu.memory_space<vmem>>, vector<1x1x128xf32>
    %64 = vector.shape_cast %63 : vector<1x1x128xf32> to vector<1x128xf32>
    %65 = vector.broadcast %51 : vector<8x1xf32> to vector<8x128xf32>
    %66 = vector.broadcast %59 : vector<1x128xf32> to vector<8x128xf32>
    %67 = arith.mulf %65, %66 : vector<8x128xf32>
    %68 = vector.broadcast %64 : vector<1x128xf32> to vector<8x128xf32>
    %69 = arith.addf %68, %67 : vector<8x128xf32>
    %70 = vector.broadcast %56 : vector<8x1xf32> to vector<8x128xf32>
    %71 = vector.broadcast %62 : vector<1x128xf32> to vector<8x128xf32>
    %72 = arith.mulf %70, %71 : vector<8x128xf32>
    %73 = arith.addf %69, %72 : vector<8x128xf32>
    %cst_38 = arith.constant 0.00999999977 : f32
    %74 = vector.broadcast %cst_38 : f32 to vector<8x128xf32>
    %75 = arith.mulf %74, %73 : vector<8x128xf32>
    %76 = arith.maximumf %73, %75 : vector<8x128xf32>
    %77 = arith.truncf %76 : vector<8x128xf32> to vector<8x128xbf16>
    %c5 = arith.constant 5 : index
    %c0_39 = arith.constant 0 : index
    %c0_40 = arith.constant 0 : index
    %78 = vector.load %arg1[%c5, %c0_39, %c0_40] : memref<8x256x256xbf16, #tpu.memory_space<vmem>>, vector<1x128x256xbf16>
    %79 = vector.shape_cast %78 : vector<1x128x256xbf16> to vector<128x256xbf16>
    %cst_41 = arith.constant dense<0.000000e+00> : vector<8x256xf32>
    %80 = tpu.matmul %77, %79, %cst_41 {dimension_numbers = #tpu.dot_dimension_numbers<[1], [0], [0], [1], [0, 0, 1, 1], [], []>} : vector<8x128xbf16>, vector<128x256xbf16>, vector<8x256xf32> -> vector<8x256xf32>
    %c5_42 = arith.constant 5 : index
    %c0_43 = arith.constant 0 : index
    %c0_44 = arith.constant 0 : index
    %81 = vector.load %arg2[%c5_42, %c0_43, %c0_44] : memref<8x1x256xf32, #tpu.memory_space<vmem>>, vector<1x1x256xf32>
    %82 = vector.shape_cast %81 : vector<1x1x256xf32> to vector<1x256xf32>
    %83 = vector.broadcast %82 : vector<1x256xf32> to vector<8x256xf32>
    %84 = arith.addf %80, %83 : vector<8x256xf32>
    %cst_45 = arith.constant 0.00999999977 : f32
    %85 = vector.broadcast %cst_45 : f32 to vector<8x256xf32>
    %86 = arith.mulf %85, %84 : vector<8x256xf32>
    %87 = arith.maximumf %84, %86 : vector<8x256xf32>
    %88 = arith.truncf %87 : vector<8x256xf32> to vector<8x256xbf16>
    %c6 = arith.constant 6 : index
    %c0_46 = arith.constant 0 : index
    %c0_47 = arith.constant 0 : index
    %89 = vector.load %arg1[%c6, %c0_46, %c0_47] : memref<8x256x256xbf16, #tpu.memory_space<vmem>>, vector<1x256x256xbf16>
    %90 = vector.shape_cast %89 : vector<1x256x256xbf16> to vector<256x256xbf16>
    %cst_48 = arith.constant dense<0.000000e+00> : vector<8x256xf32>
    %91 = tpu.matmul %88, %90, %cst_48 {dimension_numbers = #tpu.dot_dimension_numbers<[1], [0], [0], [1], [0, 0, 1, 1], [], []>} : vector<8x256xbf16>, vector<256x256xbf16>, vector<8x256xf32> -> vector<8x256xf32>
    %c6_49 = arith.constant 6 : index
    %c0_50 = arith.constant 0 : index
    %c0_51 = arith.constant 0 : index
    %92 = vector.load %arg2[%c6_49, %c0_50, %c0_51] : memref<8x1x256xf32, #tpu.memory_space<vmem>>, vector<1x1x256xf32>
    %93 = vector.shape_cast %92 : vector<1x1x256xf32> to vector<1x256xf32>
    %94 = vector.broadcast %93 : vector<1x256xf32> to vector<8x256xf32>
    %95 = arith.addf %91, %94 : vector<8x256xf32>
    %cst_52 = arith.constant 0.00999999977 : f32
    %96 = vector.broadcast %cst_52 : f32 to vector<8x256xf32>
    %97 = arith.mulf %96, %95 : vector<8x256xf32>
    %98 = arith.maximumf %95, %97 : vector<8x256xf32>
    %99 = arith.truncf %98 : vector<8x256xf32> to vector<8x256xbf16>
    %c7 = arith.constant 7 : index
    %c0_53 = arith.constant 0 : index
    %c0_54 = arith.constant 0 : index
    %100 = vector.load %arg1[%c7, %c0_53, %c0_54] : memref<8x256x256xbf16, #tpu.memory_space<vmem>>, vector<1x256x256xbf16>
    %101 = vector.shape_cast %100 : vector<1x256x256xbf16> to vector<256x256xbf16>
    %cst_55 = arith.constant dense<0.000000e+00> : vector<8x256xf32>
    %102 = tpu.matmul %99, %101, %cst_55 {dimension_numbers = #tpu.dot_dimension_numbers<[1], [0], [0], [1], [0, 0, 1, 1], [], []>} : vector<8x256xbf16>, vector<256x256xbf16>, vector<8x256xf32> -> vector<8x256xf32>
    %c7_56 = arith.constant 7 : index
    %c0_57 = arith.constant 0 : index
    %c0_58 = arith.constant 0 : index
    %103 = vector.load %arg2[%c7_56, %c0_57, %c0_58] : memref<8x1x256xf32, #tpu.memory_space<vmem>>, vector<1x1x256xf32>
    %104 = vector.shape_cast %103 : vector<1x1x256xf32> to vector<1x256xf32>
    %105 = vector.broadcast %104 : vector<1x256xf32> to vector<8x256xf32>
    %106 = arith.addf %102, %105 : vector<8x256xf32>
    %cst_59 = arith.constant 0.000000e+00 : f32
    %107 = vector.broadcast %cst_59 : f32 to vector<8x256xf32>
    %108 = arith.subf %107, %106 : vector<8x256xf32>
    %109 = math.exp %108 : vector<8x256xf32>
    %cst_60 = arith.constant 1.000000e+00 : f32
    %110 = vector.broadcast %cst_60 : f32 to vector<8x256xf32>
    %111 = arith.addf %110, %109 : vector<8x256xf32>
    %cst_61 = arith.constant 1.000000e+00 : f32
    %112 = vector.broadcast %cst_61 : f32 to vector<8x256xf32>
    %113 = arith.divf %112, %111 : vector<8x256xf32>
    %c0_62 = arith.constant 0 : index
    %c0_63 = arith.constant 0 : index
    %c0_64 = arith.constant 0 : index
    %114 = vector.load %arg3[%c0_62, %c0_63, %c0_64] : memref<2x8x256xf32, #tpu.memory_space<vmem>>, vector<1x8x256xf32>
    %115 = vector.shape_cast %114 : vector<1x8x256xf32> to vector<8x256xf32>
    %116 = vector.shape_cast %113 : vector<8x256xf32> to vector<1x8x256xf32>
    tpu.vector_store %arg3[%c0_62, %c0_63, %c0_64], %116 {strides = array<i32>} : memref<2x8x256xf32, #tpu.memory_space<vmem>>, vector<1x8x256xf32>,
    %c1_65 = arith.constant 1 : index
    %c0_66 = arith.constant 0 : index
    %c0_67 = arith.constant 0 : index
    %117 = vector.load %arg3[%c1_65, %c0_66, %c0_67] : memref<2x8x256xf32, #tpu.memory_space<vmem>>, vector<1x8x256xf32>
    %118 = vector.shape_cast %117 : vector<1x8x256xf32> to vector<8x256xf32>
    %119 = vector.shape_cast %44 : vector<8x256xf32> to vector<1x8x256xf32>
    tpu.vector_store %arg3[%c1_65, %c0_66, %c0_67], %119 {strides = array<i32>} : memref<2x8x256xf32, #tpu.memory_space<vmem>>, vector<1x8x256xf32>,
    return
  }
}

</mosaic_0001>

<llo_original>
// kernel: vae_forward.1
$region0: #{vae_forward.1}
  #allocation0 [shape = 'u32[]', space=smem, size = 0x4, offset = 0x4, fixed_abs, tag = 'smem constant byte address 0x4 - core index']
  #allocation1 [shape = 'u32[72,128]{1,0:T(1,128)}', space=vmem, size = 0x9000, scoped, tag = 'internal scratch']
  %s0 = inlined_call_operand.vmem [shape: bf16[8,128], index: 0, kind: input, shape index: {}]
  %s1 = inlined_call_operand.hbm [shape: bf16[8,256,256], index: 1, kind: input, shape index: {}]
  %s2 = inlined_call_operand.vmem [shape: f32[8,1,256], index: 2, kind: input, shape index: {}]
  %s3 = inlined_call_operand.vmem [shape: f32[2,8,256], index: 3, kind: output, shape index: {}]
  %s4 = sld [smem:[#allocation0]]
  $region26: #{vae_forward.1} parent=0
    _
  %s6 = ssub.s32 1, %s4
  %s7 = scalar_select 0, %s6, %s4
  $region1: #{vae_forward.1} parent=0
    #allocation2 [shape = 'u8[1048576]{0}', space=vmem, size = 0x100000, scoped, tag = 'input window, operand 1, single buffered']
    #allocation3 [shape = 's32[1]{0}', space=sflag, size = 0x4, scoped, tag = 'scoped memory for vae_forward.1']
    %8 = vsyncpa [#allocation3], 0
    // Predicated region
    $region2: #{vae_forward.1} parent=1 // pred_check
      _
    $region3: #{vae_forward.1} parent=1 // pred_check_branch
      %10 = sbr.rel (0) target = $region5
    $region4: #{vae_forward.1} parent=1 // pred_region
      _
    $region5: #{vae_forward.1} parent=1 // pred_fallthru
      _
    // Predicated region
    $region6: #{vae_forward.1} parent=1 // pred_check
      _
    $region7: #{vae_forward.1} parent=1 // pred_check_branch
      %12 = sbr.rel (0) target = $region9
    $region8: #{vae_forward.1} parent=1 // pred_region
      %14 = vsyncadd [#allocation3], 0
      %s15 = sshll.u32 %s1, 4
      %s16 = int_to_ptr.hbm [resolvable:$true] %s15
      %s17 = sshll.u32 [#allocation2], 4
      %s18 = int_to_ptr.vmem [resolvable:$true] %s17
      %23 = dma.hbm_to_vmem [thread:$0]  %s16, 32768, %s18, [#allocation3], 128, 128, 8
    $region9: #{vae_forward.1} parent=1 // pred_fallthru
      _
    // Predicated region
    $region10: #{vae_forward.1} parent=1 // pred_check
      _
    $region11: #{vae_forward.1} parent=1 // pred_check_branch
      %25 = sbr.rel (0) target = $region13
    $region12: #{vae_forward.1} parent=1 // pred_region
      _
    $region13: #{vae_forward.1} parent=1 // pred_fallthru
      _
    // Predicated region
    $region14: #{vae_forward.1} parent=1 // pred_check
      _
    $region15: #{vae_forward.1} parent=1 // pred_check_branch
      %27 = sbr.rel (0) target = $region17
    $region16: #{vae_forward.1} parent=1 // pred_region
      %29 = dma.done [#allocation3], 32768
    $region17: #{vae_forward.1} parent=1 // pred_fallthru
      _
    %v30 = vld [vmem:[%s0] sm:$0xf]
    %v31 = vld [vmem:[#allocation2] sm:$0xf]
    %v32 = vld [vmem:[#allocation2 + $0x8] sm:$0xf]
    %v33 = vld [vmem:[#allocation2 + $0x10] sm:$0xf]
    %v34 = vld [vmem:[#allocation2 + $0x18] sm:$0xf]
    %v35 = vld [vmem:[#allocation2 + $0x20] sm:$0xf]
    %v36 = vld [vmem:[#allocation2 + $0x28] sm:$0xf]
    %v37 = vld [vmem:[#allocation2 + $0x30] sm:$0xf]
    %v38 = vld [vmem:[#allocation2 + $0x38] sm:$0xf]
    %v39 = vld [vmem:[#allocation2 + $0x40] sm:$0xf]
    %v40 = vld [vmem:[#allocation2 + $0x48] sm:$0xf]
    %v41 = vld [vmem:[#allocation2 + $0x50] sm:$0xf]
    %v42 = vld [vmem:[#allocation2 + $0x58] sm:$0xf]
    %v43 = vld [vmem:[#allocation2 + $0x60] sm:$0xf]
    %v44 = vld [vmem:[#allocation2 + $0x68] sm:$0xf]
    %v45 = vld [vmem:[#allocation2 + $0x70] sm:$0xf]
    %v46 = vld [vmem:[#allocation2 + $0x78] sm:$0xf]
    %v47 = vld [vmem:[%s2] sm:$0x1]
    %v49 = vperm.slane %v47, 0
    %v67 = vunpack.c.l.b16 %v31
    %v68 = vunpack.c.l.b16 %v32
    %v69 = vunpack.c.l.b16 %v33
    %v70 = vunpack.c.l.b16 %v34
    %v71 = vunpack.c.l.b16 %v35
    %v72 = vunpack.c.l.b16 %v36
    %v73 = vunpack.c.l.b16 %v37
    %v74 = vunpack.c.l.b16 %v38
    %v75 = vunpack.c.l.b16 %v39
    %v76 = vunpack.c.l.b16 %v40
    %v77 = vunpack.c.l.b16 %v41
    %v78 = vunpack.c.l.b16 %v42
    %v79 = vunpack.c.l.b16 %v43
    %v80 = vunpack.c.l.b16 %v44
    %v81 = vunpack.c.l.b16 %v45
    %v82 = vunpack.c.l.b16 %v46
    %v83 = vpack.c.b16 %v68, %v67
    %v84 = vpack.c.b16 %v70, %v69
    %v85 = vpack.c.b16 %v72, %v71
    %v86 = vpack.c.b16 %v74, %v73
    %v87 = vpack.c.b16 %v76, %v75
    %v88 = vpack.c.b16 %v78, %v77
    %v89 = vpack.c.b16 %v80, %v79
    %v90 = vpack.c.b16 %v82, %v81
    %99 = vmatpush.bf16.msra.mxu0 %v90
    %100 = vmatpush.bf16.msra.mxu0 %v89
    %101 = vmatpush.bf16.msra.mxu0 %v88
    %102 = vmatpush.bf16.msra.mxu0 %v87
    %103 = vmatpush.bf16.msra.mxu0 %v86
    %104 = vmatpush.bf16.msra.mxu0 %v85
    %105 = vmatpush.bf16.msra.mxu0 %v84
    %106 = vmatpush.bf16.msra.mxu0 %v83
    %107 = vmatmul.bf16.gmra.mxu0 %v30
    %v108 = vpop.f32.mrf.mxu0
    %v109 = vadd.f32 %v49, %v108
    %v110 = vpop.f32.mrf.mxu0
    %111 = vdwg.mxu0
    %v112 = vmul.f32 %v109, 0.01
    %v113 = vmax.f32 %v109, %v112
    %v114 = vpack.c.bf16 %v113, %v113
    %s115 = scalar_lea.vmem [#allocation2], 256
    %v116 = vld [vmem:[%s115] sm:$0xff]
    %v117 = vld [vmem:[%s115 + $0x8] sm:$0xff]
    %v118 = vld [vmem:[%s115 + $0x10] sm:$0xff]
    %v119 = vld [vmem:[%s115 + $0x18] sm:$0xff]
    %v120 = vld [vmem:[%s115 + $0x20] sm:$0xff]
    %v121 = vld [vmem:[%s115 + $0x28] sm:$0xff]
    %v122 = vld [vmem:[%s115 + $0x30] sm:$0xff]
    %v123 = vld [vmem:[%s115 + $0x38] sm:$0xff]
    %v124 = vld [vmem:[%s115 + $0x40] sm:$0xff]
    %v125 = vld [vmem:[%s115 + $0x48] sm:$0xff]
    %v126 = vld [vmem:[%s115 + $0x50] sm:$0xff]
    %v127 = vld [vmem:[%s115 + $0x58] sm:$0xff]
    %v128 = vld [vmem:[%s115 + $0x60] sm:$0xff]
    %v129 = vld [vmem:[%s115 + $0x68] sm:$0xff]
    %v130 = vld [vmem:[%s115 + $0x70] sm:$0xff]
    %v131 = vld [vmem:[%s115 + $0x78] sm:$0xff]
    %s132 = scalar_lea.vmem %s2, 2
    %v133 = vld [vmem:[%s132] sm:$0x3]
    %v135 = vperm.slane %v133, 0
    %v136 = vperm.slane %v133, 1
    %v155 = vunpack.c.l.b16 %v116
    %v156 = vunpack.c.h.b16 %v116
    %v157 = vunpack.c.l.b16 %v117
    %v158 = vunpack.c.h.b16 %v117
    %v159 = vunpack.c.l.b16 %v118
    %v160 = vunpack.c.h.b16 %v118
    %v161 = vunpack.c.l.b16 %v119
    %v162 = vunpack.c.h.b16 %v119
    %v163 = vunpack.c.l.b16 %v120
    %v164 = vunpack.c.h.b16 %v120
    %v165 = vunpack.c.l.b16 %v121
    %v166 = vunpack.c.h.b16 %v121
    %v167 = vunpack.c.l.b16 %v122
    %v168 = vunpack.c.h.b16 %v122
    %v169 = vunpack.c.l.b16 %v123
    %v170 = vunpack.c.h.b16 %v123
    %v171 = vunpack.c.l.b16 %v124
    %v172 = vunpack.c.h.b16 %v124
    %v173 = vunpack.c.l.b16 %v125
    %v174 = vunpack.c.h.b16 %v125
    %v175 = vunpack.c.l.b16 %v126
    %v176 = vunpack.c.h.b16 %v126
    %v177 = vunpack.c.l.b16 %v127
    %v178 = vunpack.c.h.b16 %v127
    %v179 = vunpack.c.l.b16 %v128
    %v180 = vunpack.c.h.b16 %v128
    %v181 = vunpack.c.l.b16 %v129
    %v182 = vunpack.c.h.b16 %v129
    %v183 = vunpack.c.l.b16 %v130
    %v184 = vunpack.c.h.b16 %v130
    %v185 = vunpack.c.l.b16 %v131
    %v186 = vunpack.c.h.b16 %v131
    %v187 = vpack.c.b16 %v157, %v155
    %v188 = vpack.c.b16 %v158, %v156
    %v189 = vpack.c.b16 %v161, %v159
    %v190 = vpack.c.b16 %v162, %v160
    %v191 = vpack.c.b16 %v165, %v163
    %v192 = vpack.c.b16 %v166, %v164
    %v193 = vpack.c.b16 %v169, %v167
    %v194 = vpack.c.b16 %v170, %v168
    %v195 = vpack.c.b16 %v173, %v171
    %v196 = vpack.c.b16 %v174, %v172
    %v197 = vpack.c.b16 %v177, %v175
    %v198 = vpack.c.b16 %v178, %v176
    %v199 = vpack.c.b16 %v181, %v179
    %v200 = vpack.c.b16 %v182, %v180
    %v201 = vpack.c.b16 %v185, %v183
    %v202 = vpack.c.b16 %v186, %v184
    %219 = vmatpush.bf16.msra.mxu0 %v201
    %220 = vmatpush.bf16.msra.mxu0 %v199
    %221 = vmatpush.bf16.msra.mxu0 %v197
    %222 = vmatpush.bf16.msra.mxu0 %v195
    %223 = vmatpush.bf16.msra.mxu0 %v193
    %224 = vmatpush.bf16.msra.mxu0 %v191
    %225 = vmatpush.bf16.msra.mxu0 %v189
    %226 = vmatpush.bf16.msra.mxu0 %v187
    %227 = vmatmul.bf16.gmra.mxu0 %v114
    %v228 = vpop.f32.mrf.mxu0
    %v229 = vadd.f32 %v135, %v228
    %v230 = vpop.f32.mrf.mxu0
    %231 = vdwg.mxu0
    %232 = vmatpush.bf16.msra.mxu0 %v202
    %233 = vmatpush.bf16.msra.mxu0 %v200
    %234 = vmatpush.bf16.msra.mxu0 %v198
    %235 = vmatpush.bf16.msra.mxu0 %v196
    %236 = vmatpush.bf16.msra.mxu0 %v194
    %237 = vmatpush.bf16.msra.mxu0 %v192
    %238 = vmatpush.bf16.msra.mxu0 %v190
    %239 = vmatpush.bf16.msra.mxu0 %v188
    %240 = vmatmul.bf16.gmra.mxu0 %v114
    %v241 = vpop.f32.mrf.mxu0
    %v242 = vadd.f32 %v136, %v241
    %v243 = vpop.f32.mrf.mxu0
    %244 = vdwg.mxu0
    %v245 = vsub.f32 0.0, %v229
    %v246 = vsub.f32 0.0, %v242
    %v247 = vmul.f32 %v245, 1.442695
    %v248 = vpow.pop %v247
    %v249 = vmul.f32 %v246, 1.442695
    %v250 = vpow.pop %v249
    %v251 = vadd.f32 %v248, 1.0
    %v252 = vadd.f32 %v250, 1.0
    %v253 = vrcp.pop %v251
    %v254 = vmul.f32 %v251, %v253
    %v255 = vsub.f32 1.0, %v254
    %v256 = vmul.f32 %v253, %v255
    %v257 = vadd.f32 %v253, %v256
    %vm258 = vweird.f32 %v251
    %vm259 = vweird.f32 %v253
    %vm260 = vmor %vm258, %vm259
    %v261 = vsel %vm260, %v253, %v257
    %v262 = vand.u32 2147483647, %v251
    %vm263 = vcmp.eq.f32.partialorder %v262, 8.507059e+37
    %v264 = vand.u32 %v251, 2147483648
    %v265 = vor.u32 1.1754944e-38, %v264
    %v266 = vsel %vm263, %v265, %v261
    %v267 = vmul.f32 1.0, %v266
    %v268 = vrcp.pop %v252
    %v269 = vmul.f32 %v252, %v268
    %v270 = vsub.f32 1.0, %v269
    %v271 = vmul.f32 %v268, %v270
    %v272 = vadd.f32 %v268, %v271
    %vm273 = vweird.f32 %v252
    %vm274 = vweird.f32 %v268
    %vm275 = vmor %vm273, %vm274
    %v276 = vsel %vm275, %v268, %v272
    %v277 = vand.u32 2147483647, %v252
    %vm278 = vcmp.eq.f32.partialorder %v277, 8.507059e+37
    %v279 = vand.u32 %v252, 2147483648
    %v280 = vor.u32 1.1754944e-38, %v279
    %v281 = vsel %vm278, %v280, %v276
    %v282 = vmul.f32 1.0, %v281
    %v283 = vpack.c.bf16 %v267, %v267
    %v284 = vpack.c.bf16 %v282, %v282
    %s285 = scalar_lea.vmem [#allocation2], 512
    %v286 = vld [vmem:[%s285] sm:$0xff]
    %v287 = vld [vmem:[%s285 + $0x8] sm:$0xff]
    %v288 = vld [vmem:[%s285 + $0x10] sm:$0xff]
    %v289 = vld [vmem:[%s285 + $0x18] sm:$0xff]
    %v290 = vld [vmem:[%s285 + $0x20] sm:$0xff]
    %v291 = vld [vmem:[%s285 + $0x28] sm:$0xff]
    %v292 = vld [vmem:[%s285 + $0x30] sm:$0xff]
    %v293 = vld [vmem:[%s285 + $0x38] sm:$0xff]
    %v294 = vld [vmem:[%s285 + $0x40] sm:$0xff]
    %v295 = vld [vmem:[%s285 + $0x48] sm:$0xff]
    %v296 = vld [vmem:[%s285 + $0x50] sm:$0xff]
    %v297 = vld [vmem:[%s285 + $0x58] sm:$0xff]
    %v298 = vld [vmem:[%s285 + $0x60] sm:$0xff]
    %v299 = vld [vmem:[%s285 + $0x68] sm:$0xff]
    %v300 = vld [vmem:[%s285 + $0x70] sm:$0xff]
    %v301 = vld [vmem:[%s285 + $0x78] sm:$0xff]
    %v302 = vld [vmem:[%s285 + $0x80] sm:$0xff]
    %v303 = vld [vmem:[%s285 + $0x88] sm:$0xff]
    %v304 = vld [vmem:[%s285 + $0x90] sm:$0xff]
    %v305 = vld [vmem:[%s285 + $0x98] sm:$0xff]
    %v306 = vld [vmem:[%s285 + $0xa0] sm:$0xff]
    %v307 = vld [vmem:[%s285 + $0xa8] sm:$0xff]
    %v308 = vld [vmem:[%s285 + $0xb0] sm:$0xff]
    %v309 = vld [vmem:[%s285 + $0xb8] sm:$0xff]
    %v310 = vld [vmem:[%s285 + $0xc0] sm:$0xff]
    %v311 = vld [vmem:[%s285 + $0xc8] sm:$0xff]
    %v312 = vld [vmem:[%s285 + $0xd0] sm:$0xff]
    %v313 = vld [vmem:[%s285 + $0xd8] sm:$0xff]
    %v314 = vld [vmem:[%s285 + $0xe0] sm:$0xff]
    %v315 = vld [vmem:[%s285 + $0xe8] sm:$0xff]
    %v316 = vld [vmem:[%s285 + $0xf0] sm:$0xff]
    %v317 = vld [vmem:[%s285 + $0xf8] sm:$0xff]
    %s318 = scalar_lea.vmem %s2, 4
    %v319 = vld [vmem:[%s318] sm:$0x3]
    %v321 = vperm.slane %v319, 0
    %v322 = vperm.slane %v319, 1
    %v357 = vunpack.c.l.b16 %v286
    %v358 = vunpack.c.h.b16 %v286
    %v359 = vunpack.c.l.b16 %v287
    %v360 = vunpack.c.h.b16 %v287
    %v361 = vunpack.c.l.b16 %v288
    %v362 = vunpack.c.h.b16 %v288
    %v363 = vunpack.c.l.b16 %v289
    %v364 = vunpack.c.h.b16 %v289
    %v365 = vunpack.c.l.b16 %v290
    %v366 = vunpack.c.h.b16 %v290
    %v367 = vunpack.c.l.b16 %v291
    %v368 = vunpack.c.h.b16 %v291
    %v369 = vunpack.c.l.b16 %v292
    %v370 = vunpack.c.h.b16 %v292
    %v371 = vunpack.c.l.b16 %v293
    %v372 = vunpack.c.h.b16 %v293
    %v373 = vunpack.c.l.b16 %v294
    %v374 = vunpack.c.h.b16 %v294
    %v375 = vunpack.c.l.b16 %v295
    %v376 = vunpack.c.h.b16 %v295
    %v377 = vunpack.c.l.b16 %v296
    %v378 = vunpack.c.h.b16 %v296
    %v379 = vunpack.c.l.b16 %v297
    %v380 = vunpack.c.h.b16 %v297
    %v381 = vunpack.c.l.b16 %v298
    %v382 = vunpack.c.h.b16 %v298
    %v383 = vunpack.c.l.b16 %v299
    %v384 = vunpack.c.h.b16 %v299
    %v385 = vunpack.c.l.b16 %v300
    %v386 = vunpack.c.h.b16 %v300
    %v387 = vunpack.c.l.b16 %v301
    %v388 = vunpack.c.h.b16 %v301
    %v389 = vunpack.c.l.b16 %v302
    %v390 = vunpack.c.h.b16 %v302
    %v391 = vunpack.c.l.b16 %v303
    %v392 = vunpack.c.h.b16 %v303
    %v393 = vunpack.c.l.b16 %v304
    %v394 = vunpack.c.h.b16 %v304
    %v395 = vunpack.c.l.b16 %v305
    %v396 = vunpack.c.h.b16 %v305
    %v397 = vunpack.c.l.b16 %v306
    %v398 = vunpack.c.h.b16 %v306
    %v399 = vunpack.c.l.b16 %v307
    %v400 = vunpack.c.h.b16 %v307
    %v401 = vunpack.c.l.b16 %v308
    %v402 = vunpack.c.h.b16 %v308
    %v403 = vunpack.c.l.b16 %v309
    %v404 = vunpack.c.h.b16 %v309
    %v405 = vunpack.c.l.b16 %v310
    %v406 = vunpack.c.h.b16 %v310
    %v407 = vunpack.c.l.b16 %v311
    %v408 = vunpack.c.h.b16 %v311
    %v409 = vunpack.c.l.b16 %v312
    %v410 = vunpack.c.h.b16 %v312
    %v411 = vunpack.c.l.b16 %v313
    %v412 = vunpack.c.h.b16 %v313
    %v413 = vunpack.c.l.b16 %v314
    %v414 = vunpack.c.h.b16 %v314
    %v415 = vunpack.c.l.b16 %v315
    %v416 = vunpack.c.h.b16 %v315
    %v417 = vunpack.c.l.b16 %v316
    %v418 = vunpack.c.h.b16 %v316
    %v419 = vunpack.c.l.b16 %v317
    %v420 = vunpack.c.h.b16 %v317
    %v421 = vpack.c.b16 %v359, %v357
    %v422 = vpack.c.b16 %v360, %v358
    %v423 = vpack.c.b16 %v363, %v361
    %v424 = vpack.c.b16 %v364, %v362
    %v425 = vpack.c.b16 %v367, %v365
    %v426 = vpack.c.b16 %v368, %v366
    %v427 = vpack.c.b16 %v371, %v369
    %v428 = vpack.c.b16 %v372, %v370
    %v429 = vpack.c.b16 %v375, %v373
    %v430 = vpack.c.b16 %v376, %v374
    %v431 = vpack.c.b16 %v379, %v377
    %v432 = vpack.c.b16 %v380, %v378
    %v433 = vpack.c.b16 %v383, %v381
    %v434 = vpack.c.b16 %v384, %v382
    %v435 = vpack.c.b16 %v387, %v385
    %v436 = vpack.c.b16 %v388, %v386
    %v437 = vpack.c.b16 %v391, %v389
    %v438 = vpack.c.b16 %v392, %v390
    %v439 = vpack.c.b16 %v395, %v393
    %v440 = vpack.c.b16 %v396, %v394
    %v441 = vpack.c.b16 %v399, %v397
    %v442 = vpack.c.b16 %v400, %v398
    %v443 = vpack.c.b16 %v403, %v401
    %v444 = vpack.c.b16 %v404, %v402
    %v445 = vpack.c.b16 %v407, %v405
    %v446 = vpack.c.b16 %v408, %v406
    %v447 = vpack.c.b16 %v411, %v409
    %v448 = vpack.c.b16 %v412, %v410
    %v449 = vpack.c.b16 %v415, %v413
    %v450 = vpack.c.b16 %v416, %v414
    %v451 = vpack.c.b16 %v419, %v417
    %v452 = vpack.c.b16 %v420, %v418
    %485 = vmatpush.bf16.msra.mxu0 %v435
    %486 = vmatpush.bf16.msra.mxu0 %v433
    %487 = vmatpush.bf16.msra.mxu0 %v431
    %488 = vmatpush.bf16.msra.mxu0 %v429
    %489 = vmatpush.bf16.msra.mxu0 %v427
    %490 = vmatpush.bf16.msra.mxu0 %v425
    %491 = vmatpush.bf16.msra.mxu0 %v423
    %492 = vmatpush.bf16.msra.mxu0 %v421
    %493 = vmatmul.bf16.gmra.mxu0 %v283
    %v494 = vpop.f32.mrf.mxu0
    %v495 = vadd.f32 %v321, %v494
    %v496 = vpop.f32.mrf.mxu0
    %497 = vdwg.mxu0
    %498 = vmatpush.bf16.msra.mxu0 %v451
    %499 = vmatpush.bf16.msra.mxu0 %v449
    %500 = vmatpush.bf16.msra.mxu0 %v447
    %501 = vmatpush.bf16.msra.mxu0 %v445
    %502 = vmatpush.bf16.msra.mxu0 %v443
    %503 = vmatpush.bf16.msra.mxu0 %v441
    %504 = vmatpush.bf16.msra.mxu0 %v439
    %505 = vmatpush.bf16.msra.mxu0 %v437
    %506 = vmatmul.bf16.gmra.mxu0 %v284
    %v507 = vpop.f32.mrf.mxu0
    %v508 = vadd.f32 %v495, %v507
    %v509 = vpop.f32.mrf.mxu0
    %510 = vdwg.mxu0
    %511 = vmatpush.bf16.msra.mxu0 %v436
    %512 = vmatpush.bf16.msra.mxu0 %v434
    %513 = vmatpush.bf16.msra.mxu0 %v432
    %514 = vmatpush.bf16.msra.mxu0 %v430
    %515 = vmatpush.bf16.msra.mxu0 %v428
    %516 = vmatpush.bf16.msra.mxu0 %v426
    %517 = vmatpush.bf16.msra.mxu0 %v424
    %518 = vmatpush.bf16.msra.mxu0 %v422
    %519 = vmatmul.bf16.gmra.mxu0 %v283
    %v520 = vpop.f32.mrf.mxu0
    %v521 = vadd.f32 %v322, %v520
    %v522 = vpop.f32.mrf.mxu0
    %523 = vdwg.mxu0
    %524 = vmatpush.bf16.msra.mxu0 %v452
    %525 = vmatpush.bf16.msra.mxu0 %v450
    %526 = vmatpush.bf16.msra.mxu0 %v448
    %527 = vmatpush.bf16.msra.mxu0 %v446
    %528 = vmatpush.bf16.msra.mxu0 %v444
    %529 = vmatpush.bf16.msra.mxu0 %v442
    %530 = vmatpush.bf16.msra.mxu0 %v440
    %531 = vmatpush.bf16.msra.mxu0 %v438
    %532 = vmatmul.bf16.gmra.mxu0 %v284
    %v533 = vpop.f32.mrf.mxu0
    %v534 = vadd.f32 %v521, %v533
    %v535 = vpop.f32.mrf.mxu0
    %536 = vdwg.mxu0
    %v537 = vmul.f32 %v508, 0.01
    %v538 = vmul.f32 %v534, 0.01
    %v539 = vmax.f32 %v508, %v537
    %v540 = vmax.f32 %v534, %v538
    %v541 = vpack.c.bf16 %v539, %v539
    %v542 = vpack.c.bf16 %v540, %v540
    %s543 = scalar_lea.vmem [#allocation2], 768
    %v544 = vld [vmem:[%s543] sm:$0xff]
    %v545 = vld [vmem:[%s543 + $0x8] sm:$0xff]
    %v546 = vld [vmem:[%s543 + $0x10] sm:$0xff]
    %v547 = vld [vmem:[%s543 + $0x18] sm:$0xff]
    %v548 = vld [vmem:[%s543 + $0x20] sm:$0xff]
    %v549 = vld [vmem:[%s543 + $0x28] sm:$0xff]
    %v550 = vld [vmem:[%s543 + $0x30] sm:$0xff]
    %v551 = vld [vmem:[%s543 + $0x38] sm:$0xff]
    %v552 = vld [vmem:[%s543 + $0x40] sm:$0xff]
    %v553 = vld [vmem:[%s543 + $0x48] sm:$0xff]
    %v554 = vld [vmem:[%s543 + $0x50] sm:$0xff]
    %v555 = vld [vmem:[%s543 + $0x58] sm:$0xff]
    %v556 = vld [vmem:[%s543 + $0x60] sm:$0xff]
    %v557 = vld [vmem:[%s543 + $0x68] sm:$0xff]
    %v558 = vld [vmem:[%s543 + $0x70] sm:$0xff]
    %v559 = vld [vmem:[%s543 + $0x78] sm:$0xff]
    %v560 = vld [vmem:[%s543 + $0x80] sm:$0xff]
    %v561 = vld [vmem:[%s543 + $0x88] sm:$0xff]
    %v562 = vld [vmem:[%s543 + $0x90] sm:$0xff]
    %v563 = vld [vmem:[%s543 + $0x98] sm:$0xff]
    %v564 = vld [vmem:[%s543 + $0xa0] sm:$0xff]
    %v565 = vld [vmem:[%s543 + $0xa8] sm:$0xff]
    %v566 = vld [vmem:[%s543 + $0xb0] sm:$0xff]
    %v567 = vld [vmem:[%s543 + $0xb8] sm:$0xff]
    %v568 = vld [vmem:[%s543 + $0xc0] sm:$0xff]
    %v569 = vld [vmem:[%s543 + $0xc8] sm:$0xff]
    %v570 = vld [vmem:[%s543 + $0xd0] sm:$0xff]
    %v571 = vld [vmem:[%s543 + $0xd8] sm:$0xff]
    %v572 = vld [vmem:[%s543 + $0xe0] sm:$0xff]
    %v573 = vld [vmem:[%s543 + $0xe8] sm:$0xff]
    %v574 = vld [vmem:[%s543 + $0xf0] sm:$0xff]
    %v575 = vld [vmem:[%s543 + $0xf8] sm:$0xff]
    %s576 = scalar_lea.vmem %s2, 6
    %v577 = vld [vmem:[%s576] sm:$0x3]
    %v579 = vperm.slane %v577, 0
    %v580 = vperm.slane %v577, 1
    %v615 = vunpack.c.l.b16 %v544
    %v616 = vunpack.c.h.b16 %v544
    %v617 = vunpack.c.l.b16 %v545
    %v618 = vunpack.c.h.b16 %v545
    %v619 = vunpack.c.l.b16 %v546
    %v620 = vunpack.c.h.b16 %v546
    %v621 = vunpack.c.l.b16 %v547
    %v622 = vunpack.c.h.b16 %v547
    %v623 = vunpack.c.l.b16 %v548
    %v624 = vunpack.c.h.b16 %v548
    %v625 = vunpack.c.l.b16 %v549
    %v626 = vunpack.c.h.b16 %v549
    %v627 = vunpack.c.l.b16 %v550
    %v628 = vunpack.c.h.b16 %v550
    %v629 = vunpack.c.l.b16 %v551
    %v630 = vunpack.c.h.b16 %v551
    %v631 = vunpack.c.l.b16 %v552
    %v632 = vunpack.c.h.b16 %v552
    %v633 = vunpack.c.l.b16 %v553
    %v634 = vunpack.c.h.b16 %v553
    %v635 = vunpack.c.l.b16 %v554
    %v636 = vunpack.c.h.b16 %v554
    %v637 = vunpack.c.l.b16 %v555
    %v638 = vunpack.c.h.b16 %v555
    %v639 = vunpack.c.l.b16 %v556
    %v640 = vunpack.c.h.b16 %v556
    %v641 = vunpack.c.l.b16 %v557
    %v642 = vunpack.c.h.b16 %v557
    %v643 = vunpack.c.l.b16 %v558
    %v644 = vunpack.c.h.b16 %v558
    %v645 = vunpack.c.l.b16 %v559
    %v646 = vunpack.c.h.b16 %v559
    %v647 = vunpack.c.l.b16 %v560
    %v648 = vunpack.c.h.b16 %v560
    %v649 = vunpack.c.l.b16 %v561
    %v650 = vunpack.c.h.b16 %v561
    %v651 = vunpack.c.l.b16 %v562
    %v652 = vunpack.c.h.b16 %v562
    %v653 = vunpack.c.l.b16 %v563
    %v654 = vunpack.c.h.b16 %v563
    %v655 = vunpack.c.l.b16 %v564
    %v656 = vunpack.c.h.b16 %v564
    %v657 = vunpack.c.l.b16 %v565
    %v658 = vunpack.c.h.b16 %v565
    %v659 = vunpack.c.l.b16 %v566
    %v660 = vunpack.c.h.b16 %v566
    %v661 = vunpack.c.l.b16 %v567
    %v662 = vunpack.c.h.b16 %v567
    %v663 = vunpack.c.l.b16 %v568
    %v664 = vunpack.c.h.b16 %v568
    %v665 = vunpack.c.l.b16 %v569
    %v666 = vunpack.c.h.b16 %v569
    %v667 = vunpack.c.l.b16 %v570
    %v668 = vunpack.c.h.b16 %v570
    %v669 = vunpack.c.l.b16 %v571
    %v670 = vunpack.c.h.b16 %v571
    %v671 = vunpack.c.l.b16 %v572
    %v672 = vunpack.c.h.b16 %v572
    %v673 = vunpack.c.l.b16 %v573
    %v674 = vunpack.c.h.b16 %v573
    %v675 = vunpack.c.l.b16 %v574
    %v676 = vunpack.c.h.b16 %v574
    %v677 = vunpack.c.l.b16 %v575
    %v678 = vunpack.c.h.b16 %v575
    %v679 = vpack.c.b16 %v617, %v615
    %v680 = vpack.c.b16 %v618, %v616
    %v681 = vpack.c.b16 %v621, %v619
    %v682 = vpack.c.b16 %v622, %v620
    %v683 = vpack.c.b16 %v625, %v623
    %v684 = vpack.c.b16 %v626, %v624
    %v685 = vpack.c.b16 %v629, %v627
    %v686 = vpack.c.b16 %v630, %v628
    %v687 = vpack.c.b16 %v633, %v631
    %v688 = vpack.c.b16 %v634, %v632
    %v689 = vpack.c.b16 %v637, %v635
    %v690 = vpack.c.b16 %v638, %v636
    %v691 = vpack.c.b16 %v641, %v639
    %v692 = vpack.c.b16 %v642, %v640
    %v693 = vpack.c.b16 %v645, %v643
    %v694 = vpack.c.b16 %v646, %v644
    %v695 = vpack.c.b16 %v649, %v647
    %v696 = vpack.c.b16 %v650, %v648
    %v697 = vpack.c.b16 %v653, %v651
    %v698 = vpack.c.b16 %v654, %v652
    %v699 = vpack.c.b16 %v657, %v655
    %v700 = vpack.c.b16 %v658, %v656
    %v701 = vpack.c.b16 %v661, %v659
    %v702 = vpack.c.b16 %v662, %v660
    %v703 = vpack.c.b16 %v665, %v663
    %v704 = vpack.c.b16 %v666, %v664
    %v705 = vpack.c.b16 %v669, %v667
    %v706 = vpack.c.b16 %v670, %v668
    %v707 = vpack.c.b16 %v673, %v671
    %v708 = vpack.c.b16 %v674, %v672
    %v709 = vpack.c.b16 %v677, %v675
    %v710 = vpack.c.b16 %v678, %v676
    %743 = vmatpush.bf16.msra.mxu0 %v693
    %744 = vmatpush.bf16.msra.mxu0 %v691
    %745 = vmatpush.bf16.msra.mxu0 %v689
    %746 = vmatpush.bf16.msra.mxu0 %v687
    %747 = vmatpush.bf16.msra.mxu0 %v685
    %748 = vmatpush.bf16.msra.mxu0 %v683
    %749 = vmatpush.bf16.msra.mxu0 %v681
    %750 = vmatpush.bf16.msra.mxu0 %v679
    %751 = vmatmul.bf16.gmra.mxu0 %v541
    %v752 = vpop.f32.mrf.mxu0
    %v753 = vadd.f32 %v579, %v752
    %v754 = vpop.f32.mrf.mxu0
    %755 = vdwg.mxu0
    %756 = vmatpush.bf16.msra.mxu0 %v709
    %757 = vmatpush.bf16.msra.mxu0 %v707
    %758 = vmatpush.bf16.msra.mxu0 %v705
    %759 = vmatpush.bf16.msra.mxu0 %v703
    %760 = vmatpush.bf16.msra.mxu0 %v701
    %761 = vmatpush.bf16.msra.mxu0 %v699
    %762 = vmatpush.bf16.msra.mxu0 %v697
    %763 = vmatpush.bf16.msra.mxu0 %v695
    %764 = vmatmul.bf16.gmra.mxu0 %v542
    %v765 = vpop.f32.mrf.mxu0
    %v766 = vadd.f32 %v753, %v765
    %v767 = vpop.f32.mrf.mxu0
    %768 = vdwg.mxu0
    %769 = vmatpush.bf16.msra.mxu0 %v694
    %770 = vmatpush.bf16.msra.mxu0 %v692
    %771 = vmatpush.bf16.msra.mxu0 %v690
    %772 = vmatpush.bf16.msra.mxu0 %v688
    %773 = vmatpush.bf16.msra.mxu0 %v686
    %774 = vmatpush.bf16.msra.mxu0 %v684
    %775 = vmatpush.bf16.msra.mxu0 %v682
    %776 = vmatpush.bf16.msra.mxu0 %v680
    %777 = vmatmul.bf16.gmra.mxu0 %v541
    %v778 = vpop.f32.mrf.mxu0
    %v779 = vadd.f32 %v580, %v778
    %v780 = vpop.f32.mrf.mxu0
    %781 = vdwg.mxu0
    %782 = vmatpush.bf16.msra.mxu0 %v710
    %783 = vmatpush.bf16.msra.mxu0 %v708
    %784 = vmatpush.bf16.msra.mxu0 %v706
    %785 = vmatpush.bf16.msra.mxu0 %v704
    %786 = vmatpush.bf16.msra.mxu0 %v702
    %787 = vmatpush.bf16.msra.mxu0 %v700
    %788 = vmatpush.bf16.msra.mxu0 %v698
    %789 = vmatpush.bf16.msra.mxu0 %v696
    %790 = vmatmul.bf16.gmra.mxu0 %v542
    %v791 = vpop.f32.mrf.mxu0
    %v792 = vadd.f32 %v779, %v791
    %v793 = vpop.f32.mrf.mxu0
    %794 = vdwg.mxu0
    %v795 = vunpack.c.l.bf16 %v30
    %797 = vrot.lane.b32.xlu0 %v795, 2
    %v798 = vpop.permute.xlu0 %797
    %v800 = vmul.f32 %v792, %v798
    %v801 = vadd.f32 %v766, %v800
    %s802 = scalar_lea.vmem [#allocation2], 1024
    %v803 = vld [vmem:[%s802] sm:$0x1]
    %v804 = vunpack.c.l.bf16 %v803
    %s805 = scalar_lea.vmem %s2, 8
    %v806 = vld [vmem:[%s805] sm:$0x1]
    %808 = vset.pattern.permute.xlu0 0
    %809 = vperm.xlu0 %808, %v801
    %v810 = vpop.permute.xlu0 %809
    %v812 = vperm.slane %v804, 0
    %v813 = vmul.f32 %v810, %v812
    %v815 = vperm.slane %v806, 0
    %v817 = vadd.f32 %v815, %v813
    %818 = vset.pattern.permute.xlu0 1
    %819 = vperm.xlu0 %818, %v801
    %v820 = vpop.permute.xlu0 %819
    %v822 = vperm.slane %v804, 1
    %v823 = vmul.f32 %v820, %v822
    %v824 = vadd.f32 %v817, %v823
    %v825 = vmul.f32 %v824, 0.01
    %v826 = vmax.f32 %v824, %v825
    %v827 = vpack.c.bf16 %v826, %v826
    %s828 = scalar_lea.vmem [#allocation2], 1280
    %v829 = vld [vmem:[%s828] sm:$0xff]
    %v830 = vld [vmem:[%s828 + $0x8] sm:$0xff]
    %v831 = vld [vmem:[%s828 + $0x10] sm:$0xff]
    %v832 = vld [vmem:[%s828 + $0x18] sm:$0xff]
    %v833 = vld [vmem:[%s828 + $0x20] sm:$0xff]
    %v834 = vld [vmem:[%s828 + $0x28] sm:$0xff]
    %v835 = vld [vmem:[%s828 + $0x30] sm:$0xff]
    %v836 = vld [vmem:[%s828 + $0x38] sm:$0xff]
    %v837 = vld [vmem:[%s828 + $0x40] sm:$0xff]
    %v838 = vld [vmem:[%s828 + $0x48] sm:$0xff]
    %v839 = vld [vmem:[%s828 + $0x50] sm:$0xff]
    %v840 = vld [vmem:[%s828 + $0x58] sm:$0xff]
    %v841 = vld [vmem:[%s828 + $0x60] sm:$0xff]
    %v842 = vld [vmem:[%s828 + $0x68] sm:$0xff]
    %v843 = vld [vmem:[%s828 + $0x70] sm:$0xff]
    %v844 = vld [vmem:[%s828 + $0x78] sm:$0xff]
    %s845 = scalar_lea.vmem %s2, 10
    %v846 = vld [vmem:[%s845] sm:$0x3]
    %v848 = vperm.slane %v846, 0
    %v849 = vperm.slane %v846, 1
    %v868 = vunpack.c.l.b16 %v829
    %v869 = vunpack.c.h.b16 %v829
    %v870 = vunpack.c.l.b16 %v830
    %v871 = vunpack.c.h.b16 %v830
    %v872 = vunpack.c.l.b16 %v831
    %v873 = vunpack.c.h.b16 %v831
    %v874 = vunpack.c.l.b16 %v832
    %v875 = vunpack.c.h.b16 %v832
    %v876 = vunpack.c.l.b16 %v833
    %v877 = vunpack.c.h.b16 %v833
    %v878 = vunpack.c.l.b16 %v834
    %v879 = vunpack.c.h.b16 %v834
    %v880 = vunpack.c.l.b16 %v835
    %v881 = vunpack.c.h.b16 %v835
    %v882 = vunpack.c.l.b16 %v836
    %v883 = vunpack.c.h.b16 %v836
    %v884 = vunpack.c.l.b16 %v837
    %v885 = vunpack.c.h.b16 %v837
    %v886 = vunpack.c.l.b16 %v838
    %v887 = vunpack.c.h.b16 %v838
    %v888 = vunpack.c.l.b16 %v839
    %v889 = vunpack.c.h.b16 %v839
    %v890 = vunpack.c.l.b16 %v840
    %v891 = vunpack.c.h.b16 %v840
    %v892 = vunpack.c.l.b16 %v841
    %v893 = vunpack.c.h.b16 %v841
    %v894 = vunpack.c.l.b16 %v842
    %v895 = vunpack.c.h.b16 %v842
    %v896 = vunpack.c.l.b16 %v843
    %v897 = vunpack.c.h.b16 %v843
    %v898 = vunpack.c.l.b16 %v844
    %v899 = vunpack.c.h.b16 %v844
    %v900 = vpack.c.b16 %v870, %v868
    %v901 = vpack.c.b16 %v871, %v869
    %v902 = vpack.c.b16 %v874, %v872
    %v903 = vpack.c.b16 %v875, %v873
    %v904 = vpack.c.b16 %v878, %v876
    %v905 = vpack.c.b16 %v879, %v877
    %v906 = vpack.c.b16 %v882, %v880
    %v907 = vpack.c.b16 %v883, %v881
    %v908 = vpack.c.b16 %v886, %v884
    %v909 = vpack.c.b16 %v887, %v885
    %v910 = vpack.c.b16 %v890, %v888
    %v911 = vpack.c.b16 %v891, %v889
    %v912 = vpack.c.b16 %v894, %v892
    %v913 = vpack.c.b16 %v895, %v893
    %v914 = vpack.c.b16 %v898, %v896
    %v915 = vpack.c.b16 %v899, %v897
    %932 = vmatpush.bf16.msra.mxu0 %v914
    %933 = vmatpush.bf16.msra.mxu0 %v912
    %934 = vmatpush.bf16.msra.mxu0 %v910
    %935 = vmatpush.bf16.msra.mxu0 %v908
    %936 = vmatpush.bf16.msra.mxu0 %v906
    %937 = vmatpush.bf16.msra.mxu0 %v904
    %938 = vmatpush.bf16.msra.mxu0 %v902
    %939 = vmatpush.bf16.msra.mxu0 %v900
    %940 = vmatmul.bf16.gmra.mxu0 %v827
    %v941 = vpop.f32.mrf.mxu0
    %v942 = vadd.f32 %v848, %v941
    %v943 = vpop.f32.mrf.mxu0
    %944 = vdwg.mxu0
    %945 = vmatpush.bf16.msra.mxu0 %v915
    %946 = vmatpush.bf16.msra.mxu0 %v913
    %947 = vmatpush.bf16.msra.mxu0 %v911
    %948 = vmatpush.bf16.msra.mxu0 %v909
    %949 = vmatpush.bf16.msra.mxu0 %v907
    %950 = vmatpush.bf16.msra.mxu0 %v905
    %951 = vmatpush.bf16.msra.mxu0 %v903
    %952 = vmatpush.bf16.msra.mxu0 %v901
    %953 = vmatmul.bf16.gmra.mxu0 %v827
    %v954 = vpop.f32.mrf.mxu0
    %v955 = vadd.f32 %v849, %v954
    %v956 = vpop.f32.mrf.mxu0
    %957 = vdwg.mxu0
    %v958 = vmul.f32 %v942, 0.01
    %v959 = vmul.f32 %v955, 0.01
    %v960 = vmax.f32 %v942, %v958
    %v961 = vmax.f32 %v955, %v959
    %v962 = vpack.c.bf16 %v960, %v960
    %v963 = vpack.c.bf16 %v961, %v961
    %s964 = scalar_lea.vmem [#allocation2], 1536
    %v965 = vld [vmem:[%s964] sm:$0xff]
    %v966 = vld [vmem:[%s964 + $0x8] sm:$0xff]
    %v967 = vld [vmem:[%s964 + $0x10] sm:$0xff]
    %v968 = vld [vmem:[%s964 + $0x18] sm:$0xff]
    %v969 = vld [vmem:[%s964 + $0x20] sm:$0xff]
    %v970 = vld [vmem:[%s964 + $0x28] sm:$0xff]
    %v971 = vld [vmem:[%s964 + $0x30] sm:$0xff]
    %v972 = vld [vmem:[%s964 + $0x38] sm:$0xff]
    %v973 = vld [vmem:[%s964 + $0x40] sm:$0xff]
    %v974 = vld [vmem:[%s964 + $0x48] sm:$0xff]
    %v975 = vld [vmem:[%s964 + $0x50] sm:$0xff]
    %v976 = vld [vmem:[%s964 + $0x58] sm:$0xff]
    %v977 = vld [vmem:[%s964 + $0x60] sm:$0xff]
    %v978 = vld [vmem:[%s964 + $0x68] sm:$0xff]
    %v979 = vld [vmem:[%s964 + $0x70] sm:$0xff]
    %v980 = vld [vmem:[%s964 + $0x78] sm:$0xff]
    %v981 = vld [vmem:[%s964 + $0x80] sm:$0xff]
    %v982 = vld [vmem:[%s964 + $0x88] sm:$0xff]
    %v983 = vld [vmem:[%s964 + $0x90] sm:$0xff]
    %v984 = vld [vmem:[%s964 + $0x98] sm:$0xff]
    %v985 = vld [vmem:[%s964 + $0xa0] sm:$0xff]
    %v986 = vld [vmem:[%s964 + $0xa8] sm:$0xff]
    %v987 = vld [vmem:[%s964 + $0xb0] sm:$0xff]
    %v988 = vld [vmem:[%s964 + $0xb8] sm:$0xff]
    %v989 = vld [vmem:[%s964 + $0xc0] sm:$0xff]
    %v990 = vld [vmem:[%s964 + $0xc8] sm:$0xff]
    %v991 = vld [vmem:[%s964 + $0xd0] sm:$0xff]
    %v992 = vld [vmem:[%s964 + $0xd8] sm:$0xff]
    %v993 = vld [vmem:[%s964 + $0xe0] sm:$0xff]
    %v994 = vld [vmem:[%s964 + $0xe8] sm:$0xff]
    %v995 = vld [vmem:[%s964 + $0xf0] sm:$0xff]
    %v996 = vld [vmem:[%s964 + $0xf8] sm:$0xff]
    %s997 = scalar_lea.vmem %s2, 12
    %v998 = vld [vmem:[%s997] sm:$0x3]
    %v1000 = vperm.slane %v998, 0
    %v1001 = vperm.slane %v998, 1
    %v1036 = vunpack.c.l.b16 %v965
    %v1037 = vunpack.c.h.b16 %v965
    %v1038 = vunpack.c.l.b16 %v966
    %v1039 = vunpack.c.h.b16 %v966
    %v1040 = vunpack.c.l.b16 %v967
    %v1041 = vunpack.c.h.b16 %v967
    %v1042 = vunpack.c.l.b16 %v968
    %v1043 = vunpack.c.h.b16 %v968
    %v1044 = vunpack.c.l.b16 %v969
    %v1045 = vunpack.c.h.b16 %v969
    %v1046 = vunpack.c.l.b16 %v970
    %v1047 = vunpack.c.h.b16 %v970
    %v1048 = vunpack.c.l.b16 %v971
    %v1049 = vunpack.c.h.b16 %v971
    %v1050 = vunpack.c.l.b16 %v972
    %v1051 = vunpack.c.h.b16 %v972
    %v1052 = vunpack.c.l.b16 %v973
    %v1053 = vunpack.c.h.b16 %v973
    %v1054 = vunpack.c.l.b16 %v974
    %v1055 = vunpack.c.h.b16 %v974
    %v1056 = vunpack.c.l.b16 %v975
    %v1057 = vunpack.c.h.b16 %v975
    %v1058 = vunpack.c.l.b16 %v976
    %v1059 = vunpack.c.h.b16 %v976
    %v1060 = vunpack.c.l.b16 %v977
    %v1061 = vunpack.c.h.b16 %v977
    %v1062 = vunpack.c.l.b16 %v978
    %v1063 = vunpack.c.h.b16 %v978
    %v1064 = vunpack.c.l.b16 %v979
    %v1065 = vunpack.c.h.b16 %v979
    %v1066 = vunpack.c.l.b16 %v980
    %v1067 = vunpack.c.h.b16 %v980
    %v1068 = vunpack.c.l.b16 %v981
    %v1069 = vunpack.c.h.b16 %v981
    %v1070 = vunpack.c.l.b16 %v982
    %v1071 = vunpack.c.h.b16 %v982
    %v1072 = vunpack.c.l.b16 %v983
    %v1073 = vunpack.c.h.b16 %v983
    %v1074 = vunpack.c.l.b16 %v984
    %v1075 = vunpack.c.h.b16 %v984
    %v1076 = vunpack.c.l.b16 %v985
    %v1077 = vunpack.c.h.b16 %v985
    %v1078 = vunpack.c.l.b16 %v986
    %v1079 = vunpack.c.h.b16 %v986
    %v1080 = vunpack.c.l.b16 %v987
    %v1081 = vunpack.c.h.b16 %v987
    %v1082 = vunpack.c.l.b16 %v988
    %v1083 = vunpack.c.h.b16 %v988
    %v1084 = vunpack.c.l.b16 %v989
    %v1085 = vunpack.c.h.b16 %v989
    %v1086 = vunpack.c.l.b16 %v990
    %v1087 = vunpack.c.h.b16 %v990
    %v1088 = vunpack.c.l.b16 %v991
    %v1089 = vunpack.c.h.b16 %v991
    %v1090 = vunpack.c.l.b16 %v992
    %v1091 = vunpack.c.h.b16 %v992
    %v1092 = vunpack.c.l.b16 %v993
    %v1093 = vunpack.c.h.b16 %v993
    %v1094 = vunpack.c.l.b16 %v994
    %v1095 = vunpack.c.h.b16 %v994
    %v1096 = vunpack.c.l.b16 %v995
    %v1097 = vunpack.c.h.b16 %v995
    %v1098 = vunpack.c.l.b16 %v996
    %v1099 = vunpack.c.h.b16 %v996
    %v1100 = vpack.c.b16 %v1038, %v1036
    %v1101 = vpack.c.b16 %v1039, %v1037
    %v1102 = vpack.c.b16 %v1042, %v1040
    %v1103 = vpack.c.b16 %v1043, %v1041
    %v1104 = vpack.c.b16 %v1046, %v1044
    %v1105 = vpack.c.b16 %v1047, %v1045
    %v1106 = vpack.c.b16 %v1050, %v1048
    %v1107 = vpack.c.b16 %v1051, %v1049
    %v1108 = vpack.c.b16 %v1054, %v1052
    %v1109 = vpack.c.b16 %v1055, %v1053
    %v1110 = vpack.c.b16 %v1058, %v1056
    %v1111 = vpack.c.b16 %v1059, %v1057
    %v1112 = vpack.c.b16 %v1062, %v1060
    %v1113 = vpack.c.b16 %v1063, %v1061
    %v1114 = vpack.c.b16 %v1066, %v1064
    %v1115 = vpack.c.b16 %v1067, %v1065
    %v1116 = vpack.c.b16 %v1070, %v1068
    %v1117 = vpack.c.b16 %v1071, %v1069
    %v1118 = vpack.c.b16 %v1074, %v1072
    %v1119 = vpack.c.b16 %v1075, %v1073
    %v1120 = vpack.c.b16 %v1078, %v1076
    %v1121 = vpack.c.b16 %v1079, %v1077
    %v1122 = vpack.c.b16 %v1082, %v1080
    %v1123 = vpack.c.b16 %v1083, %v1081
    %v1124 = vpack.c.b16 %v1086, %v1084
    %v1125 = vpack.c.b16 %v1087, %v1085
    %v1126 = vpack.c.b16 %v1090, %v1088
    %v1127 = vpack.c.b16 %v1091, %v1089
    %v1128 = vpack.c.b16 %v1094, %v1092
    %v1129 = vpack.c.b16 %v1095, %v1093
    %v1130 = vpack.c.b16 %v1098, %v1096
    %v1131 = vpack.c.b16 %v1099, %v1097
    %1164 = vmatpush.bf16.msra.mxu0 %v1114
    %1165 = vmatpush.bf16.msra.mxu0 %v1112
    %1166 = vmatpush.bf16.msra.mxu0 %v1110
    %1167 = vmatpush.bf16.msra.mxu0 %v1108
    %1168 = vmatpush.bf16.msra.mxu0 %v1106
    %1169 = vmatpush.bf16.msra.mxu0 %v1104
    %1170 = vmatpush.bf16.msra.mxu0 %v1102
    %1171 = vmatpush.bf16.msra.mxu0 %v1100
    %1172 = vmatmul.bf16.gmra.mxu0 %v962
    %v1173 = vpop.f32.mrf.mxu0
    %v1174 = vadd.f32 %v1000, %v1173
    %v1175 = vpop.f32.mrf.mxu0
    %1176 = vdwg.mxu0
    %1177 = vmatpush.bf16.msra.mxu0 %v1130
    %1178 = vmatpush.bf16.msra.mxu0 %v1128
    %1179 = vmatpush.bf16.msra.mxu0 %v1126
    %1180 = vmatpush.bf16.msra.mxu0 %v1124
    %1181 = vmatpush.bf16.msra.mxu0 %v1122
    %1182 = vmatpush.bf16.msra.mxu0 %v1120
    %1183 = vmatpush.bf16.msra.mxu0 %v1118
    %1184 = vmatpush.bf16.msra.mxu0 %v1116
    %1185 = vmatmul.bf16.gmra.mxu0 %v963
    %v1186 = vpop.f32.mrf.mxu0
    %v1187 = vadd.f32 %v1174, %v1186
    %v1188 = vpop.f32.mrf.mxu0
    %1189 = vdwg.mxu0
    %1190 = vmatpush.bf16.msra.mxu0 %v1115
    %1191 = vmatpush.bf16.msra.mxu0 %v1113
    %1192 = vmatpush.bf16.msra.mxu0 %v1111
    %1193 = vmatpush.bf16.msra.mxu0 %v1109
    %1194 = vmatpush.bf16.msra.mxu0 %v1107
    %1195 = vmatpush.bf16.msra.mxu0 %v1105
    %1196 = vmatpush.bf16.msra.mxu0 %v1103
    %1197 = vmatpush.bf16.msra.mxu0 %v1101
    %1198 = vmatmul.bf16.gmra.mxu0 %v962
    %v1199 = vpop.f32.mrf.mxu0
    %v1200 = vadd.f32 %v1001, %v1199
    %v1201 = vpop.f32.mrf.mxu0
    %1202 = vdwg.mxu0
    %1203 = vmatpush.bf16.msra.mxu0 %v1131
    %1204 = vmatpush.bf16.msra.mxu0 %v1129
    %1205 = vmatpush.bf16.msra.mxu0 %v1127
    %1206 = vmatpush.bf16.msra.mxu0 %v1125
    %1207 = vmatpush.bf16.msra.mxu0 %v1123
    %1208 = vmatpush.bf16.msra.mxu0 %v1121
    %1209 = vmatpush.bf16.msra.mxu0 %v1119
    %1210 = vmatpush.bf16.msra.mxu0 %v1117
    %1211 = vmatmul.bf16.gmra.mxu0 %v963
    %v1212 = vpop.f32.mrf.mxu0
    %v1213 = vadd.f32 %v1200, %v1212
    %v1214 = vpop.f32.mrf.mxu0
    %1215 = vdwg.mxu0
    %v1216 = vmul.f32 %v1187, 0.01
    %v1217 = vmul.f32 %v1213, 0.01
    %v1218 = vmax.f32 %v1187, %v1216
    %v1219 = vmax.f32 %v1213, %v1217
    %v1220 = vpack.c.bf16 %v1218, %v1218
    %v1221 = vpack.c.bf16 %v1219, %v1219
    %s1222 = scalar_lea.vmem [#allocation2], 1792
    %v1223 = vld [vmem:[%s1222] sm:$0xff]
    %v1224 = vld [vmem:[%s1222 + $0x8] sm:$0xff]
    %v1225 = vld [vmem:[%s1222 + $0x10] sm:$0xff]
    %v1226 = vld [vmem:[%s1222 + $0x18] sm:$0xff]
    %v1227 = vld [vmem:[%s1222 + $0x20] sm:$0xff]
    %v1228 = vld [vmem:[%s1222 + $0x28] sm:$0xff]
    %v1229 = vld [vmem:[%s1222 + $0x30] sm:$0xff]
    %v1230 = vld [vmem:[%s1222 + $0x38] sm:$0xff]
    %v1231 = vld [vmem:[%s1222 + $0x40] sm:$0xff]
    %v1232 = vld [vmem:[%s1222 + $0x48] sm:$0xff]
    %v1233 = vld [vmem:[%s1222 + $0x50] sm:$0xff]
    %v1234 = vld [vmem:[%s1222 + $0x58] sm:$0xff]
    %v1235 = vld [vmem:[%s1222 + $0x60] sm:$0xff]
    %v1236 = vld [vmem:[%s1222 + $0x68] sm:$0xff]
    %v1237 = vld [vmem:[%s1222 + $0x70] sm:$0xff]
    %v1238 = vld [vmem:[%s1222 + $0x78] sm:$0xff]
    %v1239 = vld [vmem:[%s1222 + $0x80] sm:$0xff]
    %v1240 = vld [vmem:[%s1222 + $0x88] sm:$0xff]
    %v1241 = vld [vmem:[%s1222 + $0x90] sm:$0xff]
    %v1242 = vld [vmem:[%s1222 + $0x98] sm:$0xff]
    %v1243 = vld [vmem:[%s1222 + $0xa0] sm:$0xff]
    %v1244 = vld [vmem:[%s1222 + $0xa8] sm:$0xff]
    %v1245 = vld [vmem:[%s1222 + $0xb0] sm:$0xff]
    %v1246 = vld [vmem:[%s1222 + $0xb8] sm:$0xff]
    %v1247 = vld [vmem:[%s1222 + $0xc0] sm:$0xff]
    %v1248 = vld [vmem:[%s1222 + $0xc8] sm:$0xff]
    %v1249 = vld [vmem:[%s1222 + $0xd0] sm:$0xff]
    %v1250 = vld [vmem:[%s1222 + $0xd8] sm:$0xff]
    %v1251 = vld [vmem:[%s1222 + $0xe0] sm:$0xff]
    %v1252 = vld [vmem:[%s1222 + $0xe8] sm:$0xff]
    %v1253 = vld [vmem:[%s1222 + $0xf0] sm:$0xff]
    %v1254 = vld [vmem:[%s1222 + $0xf8] sm:$0xff]
    %s1255 = scalar_lea.vmem %s2, 14
    %v1256 = vld [vmem:[%s1255] sm:$0x3]
    %v1258 = vperm.slane %v1256, 0
    %v1259 = vperm.slane %v1256, 1
    %v1294 = vunpack.c.l.b16 %v1223
    %v1295 = vunpack.c.h.b16 %v1223
    %v1296 = vunpack.c.l.b16 %v1224
    %v1297 = vunpack.c.h.b16 %v1224
    %v1298 = vunpack.c.l.b16 %v1225
    %v1299 = vunpack.c.h.b16 %v1225
    %v1300 = vunpack.c.l.b16 %v1226
    %v1301 = vunpack.c.h.b16 %v1226
    %v1302 = vunpack.c.l.b16 %v1227
    %v1303 = vunpack.c.h.b16 %v1227
    %v1304 = vunpack.c.l.b16 %v1228
    %v1305 = vunpack.c.h.b16 %v1228
    %v1306 = vunpack.c.l.b16 %v1229
    %v1307 = vunpack.c.h.b16 %v1229
    %v1308 = vunpack.c.l.b16 %v1230
    %v1309 = vunpack.c.h.b16 %v1230
    %v1310 = vunpack.c.l.b16 %v1231
    %v1311 = vunpack.c.h.b16 %v1231
    %v1312 = vunpack.c.l.b16 %v1232
    %v1313 = vunpack.c.h.b16 %v1232
    %v1314 = vunpack.c.l.b16 %v1233
    %v1315 = vunpack.c.h.b16 %v1233
    %v1316 = vunpack.c.l.b16 %v1234
    %v1317 = vunpack.c.h.b16 %v1234
    %v1318 = vunpack.c.l.b16 %v1235
    %v1319 = vunpack.c.h.b16 %v1235
    %v1320 = vunpack.c.l.b16 %v1236
    %v1321 = vunpack.c.h.b16 %v1236
    %v1322 = vunpack.c.l.b16 %v1237
    %v1323 = vunpack.c.h.b16 %v1237
    %v1324 = vunpack.c.l.b16 %v1238
    %v1325 = vunpack.c.h.b16 %v1238
    %v1326 = vunpack.c.l.b16 %v1239
    %v1327 = vunpack.c.h.b16 %v1239
    %v1328 = vunpack.c.l.b16 %v1240
    %v1329 = vunpack.c.h.b16 %v1240
    %v1330 = vunpack.c.l.b16 %v1241
    %v1331 = vunpack.c.h.b16 %v1241
    %v1332 = vunpack.c.l.b16 %v1242
    %v1333 = vunpack.c.h.b16 %v1242
    %v1334 = vunpack.c.l.b16 %v1243
    %v1335 = vunpack.c.h.b16 %v1243
    %v1336 = vunpack.c.l.b16 %v1244
    %v1337 = vunpack.c.h.b16 %v1244
    %v1338 = vunpack.c.l.b16 %v1245
    %v1339 = vunpack.c.h.b16 %v1245
    %v1340 = vunpack.c.l.b16 %v1246
    %v1341 = vunpack.c.h.b16 %v1246
    %v1342 = vunpack.c.l.b16 %v1247
    %v1343 = vunpack.c.h.b16 %v1247
    %v1344 = vunpack.c.l.b16 %v1248
    %v1345 = vunpack.c.h.b16 %v1248
    %v1346 = vunpack.c.l.b16 %v1249
    %v1347 = vunpack.c.h.b16 %v1249
    %v1348 = vunpack.c.l.b16 %v1250
    %v1349 = vunpack.c.h.b16 %v1250
    %v1350 = vunpack.c.l.b16 %v1251
    %v1351 = vunpack.c.h.b16 %v1251
    %v1352 = vunpack.c.l.b16 %v1252
    %v1353 = vunpack.c.h.b16 %v1252
    %v1354 = vunpack.c.l.b16 %v1253
    %v1355 = vunpack.c.h.b16 %v1253
    %v1356 = vunpack.c.l.b16 %v1254
    %v1357 = vunpack.c.h.b16 %v1254
    %v1358 = vpack.c.b16 %v1296, %v1294
    %v1359 = vpack.c.b16 %v1297, %v1295
    %v1360 = vpack.c.b16 %v1300, %v1298
    %v1361 = vpack.c.b16 %v1301, %v1299
    %v1362 = vpack.c.b16 %v1304, %v1302
    %v1363 = vpack.c.b16 %v1305, %v1303
    %v1364 = vpack.c.b16 %v1308, %v1306
    %v1365 = vpack.c.b16 %v1309, %v1307
    %v1366 = vpack.c.b16 %v1312, %v1310
    %v1367 = vpack.c.b16 %v1313, %v1311
    %v1368 = vpack.c.b16 %v1316, %v1314
    %v1369 = vpack.c.b16 %v1317, %v1315
    %v1370 = vpack.c.b16 %v1320, %v1318
    %v1371 = vpack.c.b16 %v1321, %v1319
    %v1372 = vpack.c.b16 %v1324, %v1322
    %v1373 = vpack.c.b16 %v1325, %v1323
    %v1374 = vpack.c.b16 %v1328, %v1326
    %v1375 = vpack.c.b16 %v1329, %v1327
    %v1376 = vpack.c.b16 %v1332, %v1330
    %v1377 = vpack.c.b16 %v1333, %v1331
    %v1378 = vpack.c.b16 %v1336, %v1334
    %v1379 = vpack.c.b16 %v1337, %v1335
    %v1380 = vpack.c.b16 %v1340, %v1338
    %v1381 = vpack.c.b16 %v1341, %v1339
    %v1382 = vpack.c.b16 %v1344, %v1342
    %v1383 = vpack.c.b16 %v1345, %v1343
    %v1384 = vpack.c.b16 %v1348, %v1346
    %v1385 = vpack.c.b16 %v1349, %v1347
    %v1386 = vpack.c.b16 %v1352, %v1350
    %v1387 = vpack.c.b16 %v1353, %v1351
    %v1388 = vpack.c.b16 %v1356, %v1354
    %v1389 = vpack.c.b16 %v1357, %v1355
    %1422 = vmatpush.bf16.msra.mxu0 %v1372
    %1423 = vmatpush.bf16.msra.mxu0 %v1370
    %1424 = vmatpush.bf16.msra.mxu0 %v1368
    %1425 = vmatpush.bf16.msra.mxu0 %v1366
    %1426 = vmatpush.bf16.msra.mxu0 %v1364
    %1427 = vmatpush.bf16.msra.mxu0 %v1362
    %1428 = vmatpush.bf16.msra.mxu0 %v1360
    %1429 = vmatpush.bf16.msra.mxu0 %v1358
    %1430 = vmatmul.bf16.gmra.mxu0 %v1220
    %v1431 = vpop.f32.mrf.mxu0
    %v1432 = vadd.f32 %v1258, %v1431
    %v1433 = vpop.f32.mrf.mxu0
    %1434 = vdwg.mxu0
    %1435 = vmatpush.bf16.msra.mxu0 %v1388
    %1436 = vmatpush.bf16.msra.mxu0 %v1386
    %1437 = vmatpush.bf16.msra.mxu0 %v1384
    %1438 = vmatpush.bf16.msra.mxu0 %v1382
    %1439 = vmatpush.bf16.msra.mxu0 %v1380
    %1440 = vmatpush.bf16.msra.mxu0 %v1378
    %1441 = vmatpush.bf16.msra.mxu0 %v1376
    %1442 = vmatpush.bf16.msra.mxu0 %v1374
    %1443 = vmatmul.bf16.gmra.mxu0 %v1221
    %v1444 = vpop.f32.mrf.mxu0
    %v1445 = vadd.f32 %v1432, %v1444
    %v1446 = vpop.f32.mrf.mxu0
    %1447 = vdwg.mxu0
    %1448 = vmatpush.bf16.msra.mxu0 %v1373
    %1449 = vmatpush.bf16.msra.mxu0 %v1371
    %1450 = vmatpush.bf16.msra.mxu0 %v1369
    %1451 = vmatpush.bf16.msra.mxu0 %v1367
    %1452 = vmatpush.bf16.msra.mxu0 %v1365
    %1453 = vmatpush.bf16.msra.mxu0 %v1363
    %1454 = vmatpush.bf16.msra.mxu0 %v1361
    %1455 = vmatpush.bf16.msra.mxu0 %v1359
    %1456 = vmatmul.bf16.gmra.mxu0 %v1220
    %v1457 = vpop.f32.mrf.mxu0
    %v1458 = vadd.f32 %v1259, %v1457
    %v1459 = vpop.f32.mrf.mxu0
    %1460 = vdwg.mxu0
    %1461 = vmatpush.bf16.msra.mxu0 %v1389
    %1462 = vmatpush.bf16.msra.mxu0 %v1387
    %1463 = vmatpush.bf16.msra.mxu0 %v1385
    %1464 = vmatpush.bf16.msra.mxu0 %v1383
    %1465 = vmatpush.bf16.msra.mxu0 %v1381
    %1466 = vmatpush.bf16.msra.mxu0 %v1379
    %1467 = vmatpush.bf16.msra.mxu0 %v1377
    %1468 = vmatpush.bf16.msra.mxu0 %v1375
    %1469 = vmatmul.bf16.gmra.mxu0 %v1221
    %v1470 = vpop.f32.mrf.mxu0
    %v1471 = vadd.f32 %v1458, %v1470
    %v1472 = vpop.f32.mrf.mxu0
    %1473 = vdwg.mxu0
    %v1474 = vsub.f32 0.0, %v1445
    %v1475 = vsub.f32 0.0, %v1471
    %v1476 = vmul.f32 %v1474, 1.442695
    %v1477 = vpow.pop %v1476
    %v1478 = vmul.f32 %v1475, 1.442695
    %v1479 = vpow.pop %v1478
    %v1480 = vadd.f32 %v1477, 1.0
    %v1481 = vadd.f32 %v1479, 1.0
    %v1482 = vrcp.pop %v1480
    %v1483 = vmul.f32 %v1480, %v1482
    %v1484 = vsub.f32 1.0, %v1483
    %v1485 = vmul.f32 %v1482, %v1484
    %v1486 = vadd.f32 %v1482, %v1485
    %vm1487 = vweird.f32 %v1480
    %vm1488 = vweird.f32 %v1482
    %vm1489 = vmor %vm1487, %vm1488
    %v1490 = vsel %vm1489, %v1482, %v1486
    %v1491 = vand.u32 2147483647, %v1480
    %vm1492 = vcmp.eq.f32.partialorder %v1491, 8.507059e+37
    %v1493 = vand.u32 %v1480, 2147483648
    %v1494 = vor.u32 1.1754944e-38, %v1493
    %v1495 = vsel %vm1492, %v1494, %v1490
    %v1496 = vmul.f32 1.0, %v1495
    %v1497 = vrcp.pop %v1481
    %v1498 = vmul.f32 %v1481, %v1497
    %v1499 = vsub.f32 1.0, %v1498
    %v1500 = vmul.f32 %v1497, %v1499
    %v1501 = vadd.f32 %v1497, %v1500
    %vm1502 = vweird.f32 %v1481
    %vm1503 = vweird.f32 %v1497
    %vm1504 = vmor %vm1502, %vm1503
    %v1505 = vsel %vm1504, %v1497, %v1501
    %v1506 = vand.u32 2147483647, %v1481
    %vm1507 = vcmp.eq.f32.partialorder %v1506, 8.507059e+37
    %v1508 = vand.u32 %v1481, 2147483648
    %v1509 = vor.u32 1.1754944e-38, %v1508
    %v1510 = vsel %vm1507, %v1509, %v1505
    %v1511 = vmul.f32 1.0, %v1510
    %1512 = vst [vmem:[%s3] sm:$0xff] %v1496
    %1513 = vst [vmem:[%s3 + $0x8] sm:$0xff] %v1511
    %s1514 = scalar_lea.vmem %s3, 16
    %1515 = vst [vmem:[%s1514] sm:$0xff] %v766
    %1516 = vst [vmem:[%s1514 + $0x8] sm:$0xff] %v792
    // Predicated region
    $region18: #{vae_forward.1} parent=1 // pred_check
      _
    $region19: #{vae_forward.1} parent=1 // pred_check_branch
      %1518 = sbr.rel (0) target = $region21
    $region20: #{vae_forward.1} parent=1 // pred_region
      _
    $region21: #{vae_forward.1} parent=1 // pred_fallthru
      _
    // Predicated region
    $region22: #{vae_forward.1} parent=1 // pred_check
      _
    $region23: #{vae_forward.1} parent=1 // pred_check_branch
      %1520 = sbr.rel (0) target = $region25
    $region24: #{vae_forward.1} parent=1 // pred_region
      _
    $region25: #{vae_forward.1} parent=1 // pred_fallthru
      _
    %1521 = vsyncpa [#allocation3], 1

</llo_original>
